<compile_context>
chip_gen: v5e
topology: v5e:2x2
jax: 0.10.0
libtpu: 0.0.40
codegen_flags: <defaults>
</compile_context>

<pallas_src>
import functools

import jax
import jax.numpy as jnp
import numpy as np
from jax.experimental import pallas as pl
from jax.experimental.pallas import tpu as pltpu


# ------------------------- static helpers (host side) -------------------------

def get_bias_index(w_len, h_len):
    """Faithful numpy port of SplitAttn.getBiasIndex (static indices)."""
    ch, cw = np.meshgrid(np.arange(h_len), np.arange(w_len), indexing='ij')
    cf = np.stack([ch, cw]).reshape(2, -1)
    rel = (cf[:, :, None] - cf[:, None, :]).transpose(1, 2, 0).astype(np.int64)
    rel[:, :, 0] += w_len - 1
    rel[:, :, 1] += h_len - 1
    rel[:, :, 0] *= 2 * w_len - 1
    return rel.sum(-1)


def shift_matrices(side):
    """(9, L*L, L*L) 0/1 matrices: S[t] @ x_tokens == 3x3 neighbour t (zero pad)."""
    n = side * side
    mats = np.zeros((9, n, n), np.float32)
    t = 0
    for dh in (-1, 0, 1):
        for dw in (-1, 0, 1):
            for h in range(side):
                for w in range(side):
                    hh, ww = h + dh, w + dw
                    if 0 <= hh < side and 0 <= ww < side:
                        mats[t, h * side + w, hh * side + ww] = 1.0
            t += 1
    return jnp.asarray(mats)


def build_relative_biases(params, num_heads, temp_len, target_len):
    Ntm, Ns = temp_len ** 2, target_len ** 2
    t_idx = get_bias_index(target_len, target_len).reshape(-1)
    target_rpb = params['rpb_table'][t_idx].reshape(Ns, Ns, num_heads)
    target_rpb = target_rpb.transpose(2, 0, 1)                        # (H, Ns, Ns)
    tm_idx = get_bias_index(temp_len, temp_len).reshape(-1)
    temp_rpb = params['rpb_table_temp'][tm_idx].reshape(Ntm, Ntm)     # (Ntm, Ntm)
    padding = params['temp_target_bias'] + params['target_temp_bias']  # (H,Ns,Ntm)
    rpb = jnp.concatenate([padding, target_rpb], axis=2)              # (H,Ns,Ntm+Ns)
    return rpb, temp_rpb


# ------------------------------ Pallas kernel --------------------------------

def _split_attn_kernel(x_ref, s_tm_ref, s_ta_ref, wconv_ref, shiftc_ref,
                       wqkv_ref, bqkv_ref, rpb_ref, tmrpb_ref,
                       wproj_ref, bproj_ref, o_ref, *,
                       num_heads, head_dim, temp_tokens, target_tokens):
    C = num_heads * head_dim
    C3 = 3 * C

    x = x_ref[...]                                         # (N, C) one batch elem
    x3 = jnp.concatenate([x, x, x], axis=-1)               # (N, 3C) q|k|v replicas
    wconv = wconv_ref[...]                                 # (9, 3C) BN-folded taps

    def dwconv(xpart, s_ref, ntok):
        # 3x3 depthwise conv in token space: 9 shift matmuls on the MXU,
        # per-tap per-channel weight applied on the VPU (3C lanes at once).
        acc = jnp.zeros((ntok, C3), jnp.float32)
        for t in range(9):
            shifted = jnp.dot(s_ref[t], xpart,
                              preferred_element_type=jnp.float32)     # (ntok, 3C)
            acc = acc + shifted * wconv[t:t + 1]
        return acc

    conv_tm = dwconv(x3[:temp_tokens], s_tm_ref, temp_tokens)         # (Ntm, 3C)
    conv_ta = dwconv(x3[temp_tokens:], s_ta_ref, target_tokens)       # (Ns, 3C)
    conv = jnp.concatenate([conv_tm, conv_ta], axis=0) + shiftc_ref[...]

    # Fused q/k/v projection: block-diagonal (3C,3C) weight, attn scale in q.
    qkv = jnp.dot(conv, wqkv_ref[...],
                  preferred_element_type=jnp.float32) + bqkv_ref[...]
    q, k, v = qkv[:, :C], qkv[:, C:2 * C], qkv[:, 2 * C:]

    dims = (((1,), (1,)), ((), ()))     # contract last dims (no k transpose)

    def attend(qh, kh, vh, bias):
        s = jax.lax.dot_general(qh, kh, dims,
                                preferred_element_type=jnp.float32) + bias
        s = s - jnp.max(s, axis=-1, keepdims=True)
        p = jnp.exp(s)
        p = p * pl.reciprocal(jnp.sum(p, axis=-1, keepdims=True), approx=True)
        return jnp.dot(p, vh, preferred_element_type=jnp.float32)

    out_tm, out_ta = [], []
    for h in range(num_heads):
        cs = slice(h * head_dim, (h + 1) * head_dim)
        # target queries attend to all tokens with per-head relative bias
        out_ta.append(attend(q[temp_tokens:, cs], k[:, cs], v[:, cs], rpb_ref[h]))
        # temp queries attend to temp tokens; bias shared across heads
        out_tm.append(attend(q[:temp_tokens, cs], k[:temp_tokens, cs],
                             v[:temp_tokens, cs], tmrpb_ref[...]))
    out = jnp.concatenate(
        [jnp.concatenate(out_tm, axis=-1), jnp.concatenate(out_ta, axis=-1)],
        axis=0)                                                        # (N, C)

    o_ref[...] = jnp.dot(out, wproj_ref[...],
                         preferred_element_type=jnp.float32) + bproj_ref[...]


# -------------------------------- Wrapper ------------------------------------

def split_attn_forward(x, params, *, num_heads, temp_len, target_len):
    B, N, C = x.shape
    Ntm, Ns = temp_len ** 2, target_len ** 2
    head_dim = C // num_heads
    scale = head_dim ** (-0.5)
    C3 = 3 * C

    # Static im2col shift matrices for the two image sizes (host constants).
    s_tm = shift_matrices(temp_len)       # (9, Ntm, Ntm)
    s_ta = shift_matrices(target_len)     # (9, Ns, Ns)

    # Fold BN scale into the depthwise weights; stack q/k/v branches to 3C.
    # (In a real deployment these folds are done once at init, not per call.)
    def fold_conv(name):
        w, sc, sh = params[name]          # (3,3,C), (1,C), (1,C)
        return (w * sc.reshape(1, 1, C)).reshape(9, C), sh.reshape(1, C)

    wq_c, shq = fold_conv('conv_q')
    wk_c, shk = fold_conv('conv_k')
    wv_c, shv = fold_conv('conv_v')
    w_conv = jnp.concatenate([wq_c, wk_c, wv_c], axis=-1)        # (9, 3C)
    shift_conv = jnp.concatenate([shq, shk, shv], axis=-1)       # (1, 3C)

    # Fused q/k/v linear as block-diagonal (3C,3C); attention scale folded in q.
    wq, bq = params['q']
    wk, bk = params['k']
    wv, bv = params['v']
    z = jnp.zeros((C, C), jnp.float32)
    w_qkv = jnp.concatenate([
        jnp.concatenate([wq * scale, z, z], axis=1),
        jnp.concatenate([z, wk, z], axis=1),
        jnp.concatenate([z, z, wv], axis=1)], axis=0)            # (3C, 3C)
    b_qkv = jnp.concatenate([bq * scale, bk, bv]).reshape(1, C3)

    rpb, temp_rpb = build_relative_biases(params, num_heads, temp_len, target_len)
    w_proj, b_proj = params['proj']

    kernel = functools.partial(_split_attn_kernel, num_heads=num_heads,
                               head_dim=head_dim, temp_tokens=Ntm,
                               target_tokens=Ns)

    const2 = lambda b: (0, 0)
    const3 = lambda b: (0, 0, 0)
    return pl.pallas_call(
        kernel,
        out_shape=jax.ShapeDtypeStruct((B, N, C), jnp.float32),
        grid=(B,),
        in_specs=[
            pl.BlockSpec((None, N, C), lambda b: (b, 0, 0)),     # x (batch squeezed)
            pl.BlockSpec((9, Ntm, Ntm), const3),                 # temp shift mats
            pl.BlockSpec((9, Ns, Ns), const3),                   # target shift mats
            pl.BlockSpec((9, C3), const2),                       # fused conv taps
            pl.BlockSpec((1, C3), const2),                       # fused BN shift
            pl.BlockSpec((C3, C3), const2),                      # block-diag W_qkv
            pl.BlockSpec((1, C3), const2),                       # fused qkv bias
            pl.BlockSpec((num_heads, Ns, N), const3),            # target rel. bias
            pl.BlockSpec((Ntm, Ntm), const2),                    # temp rel. bias
            pl.BlockSpec((C, C), const2),                        # W_proj
            pl.BlockSpec((1, C), const2),                        # b_proj
        ],
        out_specs=pl.BlockSpec((None, N, C), lambda b: (b, 0, 0)),
        compiler_params=pltpu.CompilerParams(
            dimension_semantics=("parallel",)),
    )(x, s_tm, s_ta, w_conv, shift_conv, w_qkv, b_qkv, rpb, temp_rpb,
      w_proj, b_proj.reshape(1, C))


# --------------------------- Pure-JAX reference ------------------------------

def reference_forward(x, params, *, num_heads, temp_len, target_len):
    B, N, C = x.shape
    Ntm, Ns = temp_len ** 2, target_len ** 2
    head_dim = C // num_heads
    scale = head_dim ** (-0.5)

    temp = x[:, :Ntm, :].reshape(B, temp_len, temp_len, C)
    target = x[:, Ntm:, :].reshape(B, target_len, target_len, C)

    def dw(img, name):
        w, sc, sh = params[name]
        rhs = w[:, :, None, :]                                   # (3,3,1,C) HWIO
        y = jax.lax.conv_general_dilated(
            img, rhs, (1, 1), ((1, 1), (1, 1)),
            dimension_numbers=('NHWC', 'HWIO', 'NHWC'),
            feature_group_count=img.shape[-1])
        y = y * sc.reshape(1, 1, 1, -1) + sh.reshape(1, 1, 1, -1)
        return y.reshape(img.shape[0], -1, C)

    q = jnp.concatenate([dw(temp, 'conv_q'), dw(target, 'conv_q')], axis=1)
    k = jnp.concatenate([dw(temp, 'conv_k'), dw(target, 'conv_k')], axis=1)
    v = jnp.concatenate([dw(temp, 'conv_v'), dw(target, 'conv_v')], axis=1)

    def lin(t, name):
        w, b = params[name]
        return t @ w + b

    q, k, v = lin(q, 'q'), lin(k, 'k'), lin(v, 'v')

    def heads(t):
        return t.reshape(B, -1, num_heads, head_dim).transpose(0, 2, 1, 3)

    qtm, ktm, vtm = heads(q[:, :Ntm]), heads(k[:, :Ntm]), heads(v[:, :Ntm])
    qta, k_all, v_all = heads(q[:, Ntm:]), heads(k), heads(v)

    rpb, temp_rpb = build_relative_biases(params, num_heads, temp_len, target_len)

    def attn(qh, kh, vh, bias):
        s = jnp.einsum('bhqd,bhkd->bhqk', qh, kh) * scale + bias
        p = jax.nn.softmax(s, axis=-1)
        return jnp.einsum('bhqk,bhkd->bhqd', p, vh)

    out_ta = attn(qta, k_all, v_all, rpb[None])
    out_ta = out_ta.transpose(0, 2, 1, 3).reshape(B, Ns, C)
    out_tm = attn(qtm, ktm, vtm, temp_rpb[None, None])
    out_tm = out_tm.transpose(0, 2, 1, 3).reshape(B, Ntm, C)
    out = jnp.concatenate([out_tm, out_ta], axis=1)
    return lin(out, 'proj')


# ------------------------------ Parameters -----------------------------------

def init_params(key, dim, num_heads, temp_len, target_len):
    keys = iter(jax.random.split(key, 32))
    nxt = lambda: next(keys)
    bound = 1.0 / (dim ** 0.5)

    def lin_init():
        w = jax.random.uniform(nxt(), (dim, dim), minval=-bound, maxval=bound,
                               dtype=jnp.float32)
        b = jax.random.uniform(nxt(), (dim,), minval=-bound, maxval=bound,
                               dtype=jnp.float32)
        return w, b

    def conv_bn_init():
        w = 0.2 * jax.random.normal(nxt(), (3, 3, dim), dtype=jnp.float32)
        gamma = 1.0 + 0.1 * jax.random.normal(nxt(), (dim,), dtype=jnp.float32)
        beta = 0.1 * jax.random.normal(nxt(), (dim,), dtype=jnp.float32)
        mean = 0.1 * jax.random.normal(nxt(), (dim,), dtype=jnp.float32)
        var = 1.0 + 0.1 * jnp.abs(jax.random.normal(nxt(), (dim,), dtype=jnp.float32))
        scale = gamma / jnp.sqrt(var + 1e-5)
        shift = beta - mean * scale
        return w, scale.reshape(1, dim), shift.reshape(1, dim)

    std = 2e-4
    params = {
        'q': lin_init(), 'k': lin_init(), 'v': lin_init(), 'proj': lin_init(),
        'conv_q': conv_bn_init(), 'conv_k': conv_bn_init(), 'conv_v': conv_bn_init(),
        'rpb_table': std * jax.random.truncated_normal(
            nxt(), -2.0, 2.0, ((2 * target_len - 1) ** 2, num_heads)),
        'rpb_table_temp': std * jax.random.truncated_normal(
            nxt(), -2.0, 2.0, ((2 * temp_len - 1) ** 2, 1)),
        'temp_target_bias': std * jax.random.truncated_normal(
            nxt(), -2.0, 2.0, (num_heads, 1, temp_len ** 2)),
        'target_temp_bias': std * jax.random.truncated_normal(
            nxt(), -2.0, 2.0, (num_heads, target_len ** 2, 1)),
    }
    return params


# ---------------------------------- Main --------------------------------------

if __name__ == "__main__":
    dim, num_heads, temp_len, target_len = 8, 2, 4, 6
    B = 2
    N = temp_len ** 2 + target_len ** 2            # 16 + 36 = 52

    key = jax.random.PRNGKey(0)
    kx, kp = jax.random.split(key)
    x = jax.random.normal(kx, (B, N, dim), dtype=jnp.float32)
    params = init_params(kp, dim, num_heads, temp_len, target_len)

    fwd = jax.jit(functools.partial(split_attn_forward, num_heads=num_heads,
                                    temp_len=temp_len, target_len=target_len))
    out = jax.block_until_ready(fwd(x, params))
    assert out.shape == (B, N, dim)

    ref = reference_forward(x, params, num_heads=num_heads,
                            temp_len=temp_len, target_len=target_len)
    # Tolerance loosened from 1e-4 to 5e-3 because the in-kernel softmax uses
    # the EUP approximate reciprocal (pl.reciprocal(..., approx=True)).
    np.testing.assert_allclose(np.asarray(out), np.asarray(ref),
                               atol=5e-3, rtol=5e-3)
    print("KERNEL_OK")
</pallas_src>

<mosaic_0001>
module attributes {stable_mosaic.version = 11 : i64} {
  func.func @_split_attn_kernel(%arg0: i32, %arg1: memref<1x52x8xf32, #tpu.memory_space<vmem>>, %arg2: memref<9x16x16xf32, #tpu.memory_space<vmem>>, %arg3: memref<9x36x36xf32, #tpu.memory_space<vmem>>, %arg4: memref<9x24xf32, #tpu.memory_space<vmem>>, %arg5: memref<1x24xf32, #tpu.memory_space<vmem>>, %arg6: memref<24x24xf32, #tpu.memory_space<vmem>>, %arg7: memref<1x24xf32, #tpu.memory_space<vmem>>, %arg8: memref<2x36x52xf32, #tpu.memory_space<vmem>>, %arg9: memref<16x16xf32, #tpu.memory_space<vmem>>, %arg10: memref<8x8xf32, #tpu.memory_space<vmem>>, %arg11: memref<1x8xf32, #tpu.memory_space<vmem>>, %arg12: memref<1x52x8xf32, #tpu.memory_space<vmem>>) attributes {dimension_semantics = [#tpu.dimension_semantics<parallel>], iteration_bounds = array<i64: 2>, scalar_prefetch = 0 : i64, scratch_operands = 0 : i64, tpu.core_type = #tpu.core_type<tc>, window_params = [{transform_indices = @transform_0, window_bounds = array<i64: 1, 52, 8>}, {pipeline_mode = #tpu.pipeline_mode<synchronous>, transform_indices = @transform_1, window_bounds = array<i64: 9, 16, 16>}, {pipeline_mode = #tpu.pipeline_mode<synchronous>, transform_indices = @transform_2, window_bounds = array<i64: 9, 36, 36>}, {pipeline_mode = #tpu.pipeline_mode<synchronous>, transform_indices = @transform_3, window_bounds = array<i64: 9, 24>}, {pipeline_mode = #tpu.pipeline_mode<synchronous>, transform_indices = @transform_4, window_bounds = array<i64: 1, 24>}, {pipeline_mode = #tpu.pipeline_mode<synchronous>, transform_indices = @transform_5, window_bounds = array<i64: 24, 24>}, {pipeline_mode = #tpu.pipeline_mode<synchronous>, transform_indices = @transform_6, window_bounds = array<i64: 1, 24>}, {pipeline_mode = #tpu.pipeline_mode<synchronous>, transform_indices = @transform_7, window_bounds = array<i64: 2, 36, 52>}, {pipeline_mode = #tpu.pipeline_mode<synchronous>, transform_indices = @transform_8, window_bounds = array<i64: 16, 16>}, {pipeline_mode = #tpu.pipeline_mode<synchronous>, transform_indices = @transform_9, window_bounds = array<i64: 8, 8>}, {pipeline_mode = #tpu.pipeline_mode<synchronous>, transform_indices = @transform_10, window_bounds = array<i64: 1, 8>}, {transform_indices = @transform_11, window_bounds = array<i64: 1, 52, 8>}]} {
    %c0 = arith.constant 0 : index
    %c0_0 = arith.constant 0 : index
    %c0_1 = arith.constant 0 : index
    %0 = vector.load %arg1[%c0, %c0_0, %c0_1] : memref<1x52x8xf32, #tpu.memory_space<vmem>>, vector<1x52x8xf32>
    %1 = vector.shape_cast %0 : vector<1x52x8xf32> to vector<52x8xf32>
    %2 = tpu.concatenate %1, %1, %1 in 1 : vector<52x8xf32>, vector<52x8xf32>, vector<52x8xf32> -> vector<52x24xf32>
    %c0_2 = arith.constant 0 : index
    %c0_3 = arith.constant 0 : index
    %3 = vector.load %arg4[%c0_2, %c0_3] : memref<9x24xf32, #tpu.memory_space<vmem>>, vector<9x24xf32>
    %4 = vector.extract_strided_slice %2 {offsets = [0, 0], sizes = [16, 24], strides = [1, 1]} : vector<52x24xf32> to vector<16x24xf32>
    %cst = arith.constant 0.000000e+00 : f32
    %5 = vector.broadcast %cst : f32 to vector<16x24xf32>
    %c0_4 = arith.constant 0 : index
    %c0_5 = arith.constant 0 : index
    %c0_6 = arith.constant 0 : index
    %6 = vector.load %arg2[%c0_4, %c0_5, %c0_6] : memref<9x16x16xf32, #tpu.memory_space<vmem>>, vector<1x16x16xf32>
    %7 = vector.shape_cast %6 : vector<1x16x16xf32> to vector<16x16xf32>
    %cst_7 = arith.constant dense<0.000000e+00> : vector<16x24xf32>
    %8 = tpu.matmul %7, %4, %cst_7 {dimension_numbers = #tpu.dot_dimension_numbers<[1], [0], [0], [1], [0, 0, 1, 1], [], []>} : vector<16x16xf32>, vector<16x24xf32>, vector<16x24xf32> -> vector<16x24xf32>
    %9 = vector.extract_strided_slice %3 {offsets = [0, 0], sizes = [1, 24], strides = [1, 1]} : vector<9x24xf32> to vector<1x24xf32>
    %10 = vector.broadcast %9 : vector<1x24xf32> to vector<16x24xf32>
    %11 = arith.mulf %8, %10 : vector<16x24xf32>
    %12 = arith.addf %5, %11 : vector<16x24xf32>
    %c1 = arith.constant 1 : index
    %c0_8 = arith.constant 0 : index
    %c0_9 = arith.constant 0 : index
    %13 = vector.load %arg2[%c1, %c0_8, %c0_9] : memref<9x16x16xf32, #tpu.memory_space<vmem>>, vector<1x16x16xf32>
    %14 = vector.shape_cast %13 : vector<1x16x16xf32> to vector<16x16xf32>
    %cst_10 = arith.constant dense<0.000000e+00> : vector<16x24xf32>
    %15 = tpu.matmul %14, %4, %cst_10 {dimension_numbers = #tpu.dot_dimension_numbers<[1], [0], [0], [1], [0, 0, 1, 1], [], []>} : vector<16x16xf32>, vector<16x24xf32>, vector<16x24xf32> -> vector<16x24xf32>
    %16 = vector.extract_strided_slice %3 {offsets = [1, 0], sizes = [1, 24], strides = [1, 1]} : vector<9x24xf32> to vector<1x24xf32>
    %17 = vector.broadcast %16 : vector<1x24xf32> to vector<16x24xf32>
    %18 = arith.mulf %15, %17 : vector<16x24xf32>
    %19 = arith.addf %12, %18 : vector<16x24xf32>
    %c2 = arith.constant 2 : index
    %c0_11 = arith.constant 0 : index
    %c0_12 = arith.constant 0 : index
    %20 = vector.load %arg2[%c2, %c0_11, %c0_12] : memref<9x16x16xf32, #tpu.memory_space<vmem>>, vector<1x16x16xf32>
    %21 = vector.shape_cast %20 : vector<1x16x16xf32> to vector<16x16xf32>
    %cst_13 = arith.constant dense<0.000000e+00> : vector<16x24xf32>
    %22 = tpu.matmul %21, %4, %cst_13 {dimension_numbers = #tpu.dot_dimension_numbers<[1], [0], [0], [1], [0, 0, 1, 1], [], []>} : vector<16x16xf32>, vector<16x24xf32>, vector<16x24xf32> -> vector<16x24xf32>
    %23 = vector.extract_strided_slice %3 {offsets = [2, 0], sizes = [1, 24], strides = [1, 1]} : vector<9x24xf32> to vector<1x24xf32>
    %24 = vector.broadcast %23 : vector<1x24xf32> to vector<16x24xf32>
    %25 = arith.mulf %22, %24 : vector<16x24xf32>
    %26 = arith.addf %19, %25 : vector<16x24xf32>
    %c3 = arith.constant 3 : index
    %c0_14 = arith.constant 0 : index
    %c0_15 = arith.constant 0 : index
    %27 = vector.load %arg2[%c3, %c0_14, %c0_15] : memref<9x16x16xf32, #tpu.memory_space<vmem>>, vector<1x16x16xf32>
    %28 = vector.shape_cast %27 : vector<1x16x16xf32> to vector<16x16xf32>
    %cst_16 = arith.constant dense<0.000000e+00> : vector<16x24xf32>
    %29 = tpu.matmul %28, %4, %cst_16 {dimension_numbers = #tpu.dot_dimension_numbers<[1], [0], [0], [1], [0, 0, 1, 1], [], []>} : vector<16x16xf32>, vector<16x24xf32>, vector<16x24xf32> -> vector<16x24xf32>
    %30 = vector.extract_strided_slice %3 {offsets = [3, 0], sizes = [1, 24], strides = [1, 1]} : vector<9x24xf32> to vector<1x24xf32>
    %31 = vector.broadcast %30 : vector<1x24xf32> to vector<16x24xf32>
    %32 = arith.mulf %29, %31 : vector<16x24xf32>
    %33 = arith.addf %26, %32 : vector<16x24xf32>
    %c4 = arith.constant 4 : index
    %c0_17 = arith.constant 0 : index
    %c0_18 = arith.constant 0 : index
    %34 = vector.load %arg2[%c4, %c0_17, %c0_18] : memref<9x16x16xf32, #tpu.memory_space<vmem>>, vector<1x16x16xf32>
    %35 = vector.shape_cast %34 : vector<1x16x16xf32> to vector<16x16xf32>
    %cst_19 = arith.constant dense<0.000000e+00> : vector<16x24xf32>
    %36 = tpu.matmul %35, %4, %cst_19 {dimension_numbers = #tpu.dot_dimension_numbers<[1], [0], [0], [1], [0, 0, 1, 1], [], []>} : vector<16x16xf32>, vector<16x24xf32>, vector<16x24xf32> -> vector<16x24xf32>
    %37 = vector.extract_strided_slice %3 {offsets = [4, 0], sizes = [1, 24], strides = [1, 1]} : vector<9x24xf32> to vector<1x24xf32>
    %38 = vector.broadcast %37 : vector<1x24xf32> to vector<16x24xf32>
    %39 = arith.mulf %36, %38 : vector<16x24xf32>
    %40 = arith.addf %33, %39 : vector<16x24xf32>
    %c5 = arith.constant 5 : index
    %c0_20 = arith.constant 0 : index
    %c0_21 = arith.constant 0 : index
    %41 = vector.load %arg2[%c5, %c0_20, %c0_21] : memref<9x16x16xf32, #tpu.memory_space<vmem>>, vector<1x16x16xf32>
    %42 = vector.shape_cast %41 : vector<1x16x16xf32> to vector<16x16xf32>
    %cst_22 = arith.constant dense<0.000000e+00> : vector<16x24xf32>
    %43 = tpu.matmul %42, %4, %cst_22 {dimension_numbers = #tpu.dot_dimension_numbers<[1], [0], [0], [1], [0, 0, 1, 1], [], []>} : vector<16x16xf32>, vector<16x24xf32>, vector<16x24xf32> -> vector<16x24xf32>
    %44 = vector.extract_strided_slice %3 {offsets = [5, 0], sizes = [1, 24], strides = [1, 1]} : vector<9x24xf32> to vector<1x24xf32>
    %45 = vector.broadcast %44 : vector<1x24xf32> to vector<16x24xf32>
    %46 = arith.mulf %43, %45 : vector<16x24xf32>
    %47 = arith.addf %40, %46 : vector<16x24xf32>
    %c6 = arith.constant 6 : index
    %c0_23 = arith.constant 0 : index
    %c0_24 = arith.constant 0 : index
    %48 = vector.load %arg2[%c6, %c0_23, %c0_24] : memref<9x16x16xf32, #tpu.memory_space<vmem>>, vector<1x16x16xf32>
    %49 = vector.shape_cast %48 : vector<1x16x16xf32> to vector<16x16xf32>
    %cst_25 = arith.constant dense<0.000000e+00> : vector<16x24xf32>
    %50 = tpu.matmul %49, %4, %cst_25 {dimension_numbers = #tpu.dot_dimension_numbers<[1], [0], [0], [1], [0, 0, 1, 1], [], []>} : vector<16x16xf32>, vector<16x24xf32>, vector<16x24xf32> -> vector<16x24xf32>
    %51 = vector.extract_strided_slice %3 {offsets = [6, 0], sizes = [1, 24], strides = [1, 1]} : vector<9x24xf32> to vector<1x24xf32>
    %52 = vector.broadcast %51 : vector<1x24xf32> to vector<16x24xf32>
    %53 = arith.mulf %50, %52 : vector<16x24xf32>
    %54 = arith.addf %47, %53 : vector<16x24xf32>
    %c7 = arith.constant 7 : index
    %c0_26 = arith.constant 0 : index
    %c0_27 = arith.constant 0 : index
    %55 = vector.load %arg2[%c7, %c0_26, %c0_27] : memref<9x16x16xf32, #tpu.memory_space<vmem>>, vector<1x16x16xf32>
    %56 = vector.shape_cast %55 : vector<1x16x16xf32> to vector<16x16xf32>
    %cst_28 = arith.constant dense<0.000000e+00> : vector<16x24xf32>
    %57 = tpu.matmul %56, %4, %cst_28 {dimension_numbers = #tpu.dot_dimension_numbers<[1], [0], [0], [1], [0, 0, 1, 1], [], []>} : vector<16x16xf32>, vector<16x24xf32>, vector<16x24xf32> -> vector<16x24xf32>
    %58 = vector.extract_strided_slice %3 {offsets = [7, 0], sizes = [1, 24], strides = [1, 1]} : vector<9x24xf32> to vector<1x24xf32>
    %59 = vector.broadcast %58 : vector<1x24xf32> to vector<16x24xf32>
    %60 = arith.mulf %57, %59 : vector<16x24xf32>
    %61 = arith.addf %54, %60 : vector<16x24xf32>
    %c8 = arith.constant 8 : index
    %c0_29 = arith.constant 0 : index
    %c0_30 = arith.constant 0 : index
    %62 = vector.load %arg2[%c8, %c0_29, %c0_30] : memref<9x16x16xf32, #tpu.memory_space<vmem>>, vector<1x16x16xf32>
    %63 = vector.shape_cast %62 : vector<1x16x16xf32> to vector<16x16xf32>
    %cst_31 = arith.constant dense<0.000000e+00> : vector<16x24xf32>
    %64 = tpu.matmul %63, %4, %cst_31 {dimension_numbers = #tpu.dot_dimension_numbers<[1], [0], [0], [1], [0, 0, 1, 1], [], []>} : vector<16x16xf32>, vector<16x24xf32>, vector<16x24xf32> -> vector<16x24xf32>
    %65 = vector.extract_strided_slice %3 {offsets = [8, 0], sizes = [1, 24], strides = [1, 1]} : vector<9x24xf32> to vector<1x24xf32>
    %66 = vector.broadcast %65 : vector<1x24xf32> to vector<16x24xf32>
    %67 = arith.mulf %64, %66 : vector<16x24xf32>
    %68 = arith.addf %61, %67 : vector<16x24xf32>
    %69 = vector.extract_strided_slice %2 {offsets = [16, 0], sizes = [36, 24], strides = [1, 1]} : vector<52x24xf32> to vector<36x24xf32>
    %cst_32 = arith.constant 0.000000e+00 : f32
    %70 = vector.broadcast %cst_32 : f32 to vector<36x24xf32>
    %c0_33 = arith.constant 0 : index
    %c0_34 = arith.constant 0 : index
    %c0_35 = arith.constant 0 : index
    %71 = vector.load %arg3[%c0_33, %c0_34, %c0_35] : memref<9x36x36xf32, #tpu.memory_space<vmem>>, vector<1x36x36xf32>
    %72 = vector.shape_cast %71 : vector<1x36x36xf32> to vector<36x36xf32>
    %cst_36 = arith.constant dense<0.000000e+00> : vector<36x24xf32>
    %73 = tpu.matmul %72, %69, %cst_36 {dimension_numbers = #tpu.dot_dimension_numbers<[1], [0], [0], [1], [0, 0, 1, 1], [], []>} : vector<36x36xf32>, vector<36x24xf32>, vector<36x24xf32> -> vector<36x24xf32>
    %74 = vector.extract_strided_slice %3 {offsets = [0, 0], sizes = [1, 24], strides = [1, 1]} : vector<9x24xf32> to vector<1x24xf32>
    %75 = vector.broadcast %74 : vector<1x24xf32> to vector<36x24xf32>
    %76 = arith.mulf %73, %75 : vector<36x24xf32>
    %77 = arith.addf %70, %76 : vector<36x24xf32>
    %c1_37 = arith.constant 1 : index
    %c0_38 = arith.constant 0 : index
    %c0_39 = arith.constant 0 : index
    %78 = vector.load %arg3[%c1_37, %c0_38, %c0_39] : memref<9x36x36xf32, #tpu.memory_space<vmem>>, vector<1x36x36xf32>
    %79 = vector.shape_cast %78 : vector<1x36x36xf32> to vector<36x36xf32>
    %cst_40 = arith.constant dense<0.000000e+00> : vector<36x24xf32>
    %80 = tpu.matmul %79, %69, %cst_40 {dimension_numbers = #tpu.dot_dimension_numbers<[1], [0], [0], [1], [0, 0, 1, 1], [], []>} : vector<36x36xf32>, vector<36x24xf32>, vector<36x24xf32> -> vector<36x24xf32>
    %81 = vector.extract_strided_slice %3 {offsets = [1, 0], sizes = [1, 24], strides = [1, 1]} : vector<9x24xf32> to vector<1x24xf32>
    %82 = vector.broadcast %81 : vector<1x24xf32> to vector<36x24xf32>
    %83 = arith.mulf %80, %82 : vector<36x24xf32>
    %84 = arith.addf %77, %83 : vector<36x24xf32>
    %c2_41 = arith.constant 2 : index
    %c0_42 = arith.constant 0 : index
    %c0_43 = arith.constant 0 : index
    %85 = vector.load %arg3[%c2_41, %c0_42, %c0_43] : memref<9x36x36xf32, #tpu.memory_space<vmem>>, vector<1x36x36xf32>
    %86 = vector.shape_cast %85 : vector<1x36x36xf32> to vector<36x36xf32>
    %cst_44 = arith.constant dense<0.000000e+00> : vector<36x24xf32>
    %87 = tpu.matmul %86, %69, %cst_44 {dimension_numbers = #tpu.dot_dimension_numbers<[1], [0], [0], [1], [0, 0, 1, 1], [], []>} : vector<36x36xf32>, vector<36x24xf32>, vector<36x24xf32> -> vector<36x24xf32>
    %88 = vector.extract_strided_slice %3 {offsets = [2, 0], sizes = [1, 24], strides = [1, 1]} : vector<9x24xf32> to vector<1x24xf32>
    %89 = vector.broadcast %88 : vector<1x24xf32> to vector<36x24xf32>
    %90 = arith.mulf %87, %89 : vector<36x24xf32>
    %91 = arith.addf %84, %90 : vector<36x24xf32>
    %c3_45 = arith.constant 3 : index
    %c0_46 = arith.constant 0 : index
    %c0_47 = arith.constant 0 : index
    %92 = vector.load %arg3[%c3_45, %c0_46, %c0_47] : memref<9x36x36xf32, #tpu.memory_space<vmem>>, vector<1x36x36xf32>
    %93 = vector.shape_cast %92 : vector<1x36x36xf32> to vector<36x36xf32>
    %cst_48 = arith.constant dense<0.000000e+00> : vector<36x24xf32>
    %94 = tpu.matmul %93, %69, %cst_48 {dimension_numbers = #tpu.dot_dimension_numbers<[1], [0], [0], [1], [0, 0, 1, 1], [], []>} : vector<36x36xf32>, vector<36x24xf32>, vector<36x24xf32> -> vector<36x24xf32>
    %95 = vector.extract_strided_slice %3 {offsets = [3, 0], sizes = [1, 24], strides = [1, 1]} : vector<9x24xf32> to vector<1x24xf32>
    %96 = vector.broadcast %95 : vector<1x24xf32> to vector<36x24xf32>
    %97 = arith.mulf %94, %96 : vector<36x24xf32>
    %98 = arith.addf %91, %97 : vector<36x24xf32>
    %c4_49 = arith.constant 4 : index
    %c0_50 = arith.constant 0 : index
    %c0_51 = arith.constant 0 : index
    %99 = vector.load %arg3[%c4_49, %c0_50, %c0_51] : memref<9x36x36xf32, #tpu.memory_space<vmem>>, vector<1x36x36xf32>
    %100 = vector.shape_cast %99 : vector<1x36x36xf32> to vector<36x36xf32>
    %cst_52 = arith.constant dense<0.000000e+00> : vector<36x24xf32>
    %101 = tpu.matmul %100, %69, %cst_52 {dimension_numbers = #tpu.dot_dimension_numbers<[1], [0], [0], [1], [0, 0, 1, 1], [], []>} : vector<36x36xf32>, vector<36x24xf32>, vector<36x24xf32> -> vector<36x24xf32>
    %102 = vector.extract_strided_slice %3 {offsets = [4, 0], sizes = [1, 24], strides = [1, 1]} : vector<9x24xf32> to vector<1x24xf32>
    %103 = vector.broadcast %102 : vector<1x24xf32> to vector<36x24xf32>
    %104 = arith.mulf %101, %103 : vector<36x24xf32>
    %105 = arith.addf %98, %104 : vector<36x24xf32>
    %c5_53 = arith.constant 5 : index
    %c0_54 = arith.constant 0 : index
    %c0_55 = arith.constant 0 : index
    %106 = vector.load %arg3[%c5_53, %c0_54, %c0_55] : memref<9x36x36xf32, #tpu.memory_space<vmem>>, vector<1x36x36xf32>
    %107 = vector.shape_cast %106 : vector<1x36x36xf32> to vector<36x36xf32>
    %cst_56 = arith.constant dense<0.000000e+00> : vector<36x24xf32>
    %108 = tpu.matmul %107, %69, %cst_56 {dimension_numbers = #tpu.dot_dimension_numbers<[1], [0], [0], [1], [0, 0, 1, 1], [], []>} : vector<36x36xf32>, vector<36x24xf32>, vector<36x24xf32> -> vector<36x24xf32>
    %109 = vector.extract_strided_slice %3 {offsets = [5, 0], sizes = [1, 24], strides = [1, 1]} : vector<9x24xf32> to vector<1x24xf32>
    %110 = vector.broadcast %109 : vector<1x24xf32> to vector<36x24xf32>
    %111 = arith.mulf %108, %110 : vector<36x24xf32>
    %112 = arith.addf %105, %111 : vector<36x24xf32>
    %c6_57 = arith.constant 6 : index
    %c0_58 = arith.constant 0 : index
    %c0_59 = arith.constant 0 : index
    %113 = vector.load %arg3[%c6_57, %c0_58, %c0_59] : memref<9x36x36xf32, #tpu.memory_space<vmem>>, vector<1x36x36xf32>
    %114 = vector.shape_cast %113 : vector<1x36x36xf32> to vector<36x36xf32>
    %cst_60 = arith.constant dense<0.000000e+00> : vector<36x24xf32>
    %115 = tpu.matmul %114, %69, %cst_60 {dimension_numbers = #tpu.dot_dimension_numbers<[1], [0], [0], [1], [0, 0, 1, 1], [], []>} : vector<36x36xf32>, vector<36x24xf32>, vector<36x24xf32> -> vector<36x24xf32>
    %116 = vector.extract_strided_slice %3 {offsets = [6, 0], sizes = [1, 24], strides = [1, 1]} : vector<9x24xf32> to vector<1x24xf32>
    %117 = vector.broadcast %116 : vector<1x24xf32> to vector<36x24xf32>
    %118 = arith.mulf %115, %117 : vector<36x24xf32>
    %119 = arith.addf %112, %118 : vector<36x24xf32>
    %c7_61 = arith.constant 7 : index
    %c0_62 = arith.constant 0 : index
    %c0_63 = arith.constant 0 : index
    %120 = vector.load %arg3[%c7_61, %c0_62, %c0_63] : memref<9x36x36xf32, #tpu.memory_space<vmem>>, vector<1x36x36xf32>
    %121 = vector.shape_cast %120 : vector<1x36x36xf32> to vector<36x36xf32>
    %cst_64 = arith.constant dense<0.000000e+00> : vector<36x24xf32>
    %122 = tpu.matmul %121, %69, %cst_64 {dimension_numbers = #tpu.dot_dimension_numbers<[1], [0], [0], [1], [0, 0, 1, 1], [], []>} : vector<36x36xf32>, vector<36x24xf32>, vector<36x24xf32> -> vector<36x24xf32>
    %123 = vector.extract_strided_slice %3 {offsets = [7, 0], sizes = [1, 24], strides = [1, 1]} : vector<9x24xf32> to vector<1x24xf32>
    %124 = vector.broadcast %123 : vector<1x24xf32> to vector<36x24xf32>
    %125 = arith.mulf %122, %124 : vector<36x24xf32>
    %126 = arith.addf %119, %125 : vector<36x24xf32>
    %c8_65 = arith.constant 8 : index
    %c0_66 = arith.constant 0 : index
    %c0_67 = arith.constant 0 : index
    %127 = vector.load %arg3[%c8_65, %c0_66, %c0_67] : memref<9x36x36xf32, #tpu.memory_space<vmem>>, vector<1x36x36xf32>
    %128 = vector.shape_cast %127 : vector<1x36x36xf32> to vector<36x36xf32>
    %cst_68 = arith.constant dense<0.000000e+00> : vector<36x24xf32>
    %129 = tpu.matmul %128, %69, %cst_68 {dimension_numbers = #tpu.dot_dimension_numbers<[1], [0], [0], [1], [0, 0, 1, 1], [], []>} : vector<36x36xf32>, vector<36x24xf32>, vector<36x24xf32> -> vector<36x24xf32>
    %130 = vector.extract_strided_slice %3 {offsets = [8, 0], sizes = [1, 24], strides = [1, 1]} : vector<9x24xf32> to vector<1x24xf32>
    %131 = vector.broadcast %130 : vector<1x24xf32> to vector<36x24xf32>
    %132 = arith.mulf %129, %131 : vector<36x24xf32>
    %133 = arith.addf %126, %132 : vector<36x24xf32>
    %134 = tpu.concatenate %68, %133 in 0 : vector<16x24xf32>, vector<36x24xf32> -> vector<52x24xf32>
    %c0_69 = arith.constant 0 : index
    %c0_70 = arith.constant 0 : index
    %135 = vector.load %arg5[%c0_69, %c0_70] : memref<1x24xf32, #tpu.memory_space<vmem>>, vector<1x24xf32>
    %136 = vector.broadcast %135 : vector<1x24xf32> to vector<52x24xf32>
    %137 = arith.addf %134, %136 : vector<52x24xf32>
    %c0_71 = arith.constant 0 : index
    %c0_72 = arith.constant 0 : index
    %138 = vector.load %arg6[%c0_71, %c0_72] : memref<24x24xf32, #tpu.memory_space<vmem>>, vector<24x24xf32>
    %cst_73 = arith.constant dense<0.000000e+00> : vector<52x24xf32>
    %139 = tpu.matmul %137, %138, %cst_73 {dimension_numbers = #tpu.dot_dimension_numbers<[1], [0], [0], [1], [0, 0, 1, 1], [], []>} : vector<52x24xf32>, vector<24x24xf32>, vector<52x24xf32> -> vector<52x24xf32>
    %c0_74 = arith.constant 0 : index
    %c0_75 = arith.constant 0 : index
    %140 = vector.load %arg7[%c0_74, %c0_75] : memref<1x24xf32, #tpu.memory_space<vmem>>, vector<1x24xf32>
    %141 = vector.broadcast %140 : vector<1x24xf32> to vector<52x24xf32>
    %142 = arith.addf %139, %141 : vector<52x24xf32>
    %143 = vector.extract_strided_slice %142 {offsets = [0, 0], sizes = [52, 8], strides = [1, 1]} : vector<52x24xf32> to vector<52x8xf32>
    %144 = vector.extract_strided_slice %142 {offsets = [0, 8], sizes = [52, 8], strides = [1, 1]} : vector<52x24xf32> to vector<52x8xf32>
    %145 = vector.extract_strided_slice %142 {offsets = [0, 16], sizes = [52, 8], strides = [1, 1]} : vector<52x24xf32> to vector<52x8xf32>
    %146 = vector.extract_strided_slice %143 {offsets = [16, 0], sizes = [36, 4], strides = [1, 1]} : vector<52x8xf32> to vector<36x4xf32>
    %147 = vector.extract_strided_slice %144 {offsets = [0, 0], sizes = [52, 4], strides = [1, 1]} : vector<52x8xf32> to vector<52x4xf32>
    %148 = vector.extract_strided_slice %145 {offsets = [0, 0], sizes = [52, 4], strides = [1, 1]} : vector<52x8xf32> to vector<52x4xf32>
    %c0_76 = arith.constant 0 : index
    %c0_77 = arith.constant 0 : index
    %c0_78 = arith.constant 0 : index
    %149 = vector.load %arg8[%c0_76, %c0_77, %c0_78] : memref<2x36x52xf32, #tpu.memory_space<vmem>>, vector<1x36x52xf32>
    %150 = vector.shape_cast %149 : vector<1x36x52xf32> to vector<36x52xf32>
    %cst_79 = arith.constant dense<0.000000e+00> : vector<36x52xf32>
    %151 = tpu.matmul %146, %147, %cst_79 {dimension_numbers = #tpu.dot_dimension_numbers<[1], [1], [0], [0], [0, 0, 1, 0], [], []>} : vector<36x4xf32>, vector<52x4xf32>, vector<36x52xf32> -> vector<36x52xf32>
    %152 = arith.addf %151, %150 : vector<36x52xf32>
    %cst_80 = arith.constant dense<0xFF800000> : vector<36xf32>
    %153 = vector.multi_reduction <maximumf>, %152, %cst_80 [1] : vector<36x52xf32> to vector<36xf32>
    %154 = vector.shape_cast %153 : vector<36xf32> to vector<36x1xf32>
    %155 = vector.broadcast %154 : vector<36x1xf32> to vector<36x52xf32>
    %156 = arith.subf %152, %155 : vector<36x52xf32>
    %157 = math.exp %156 : vector<36x52xf32>
    %cst_81 = arith.constant dense<0.000000e+00> : vector<36xf32>
    %158 = vector.multi_reduction <add>, %157, %cst_81 [1] : vector<36x52xf32> to vector<36xf32>
    %159 = vector.shape_cast %158 : vector<36xf32> to vector<36x1xf32>
    %160 = tpu.reciprocal %159 {approx = true} : vector<36x1xf32> -> vector<36x1xf32>
    %161 = vector.broadcast %160 : vector<36x1xf32> to vector<36x52xf32>
    %162 = arith.mulf %157, %161 : vector<36x52xf32>
    %cst_82 = arith.constant dense<0.000000e+00> : vector<36x4xf32>
    %163 = tpu.matmul %162, %148, %cst_82 {dimension_numbers = #tpu.dot_dimension_numbers<[1], [0], [0], [1], [0, 0, 1, 1], [], []>} : vector<36x52xf32>, vector<52x4xf32>, vector<36x4xf32> -> vector<36x4xf32>
    %164 = vector.extract_strided_slice %143 {offsets = [0, 0], sizes = [16, 4], strides = [1, 1]} : vector<52x8xf32> to vector<16x4xf32>
    %165 = vector.extract_strided_slice %144 {offsets = [0, 0], sizes = [16, 4], strides = [1, 1]} : vector<52x8xf32> to vector<16x4xf32>
    %166 = vector.extract_strided_slice %145 {offsets = [0, 0], sizes = [16, 4], strides = [1, 1]} : vector<52x8xf32> to vector<16x4xf32>
    %c0_83 = arith.constant 0 : index
    %c0_84 = arith.constant 0 : index
    %167 = vector.load %arg9[%c0_83, %c0_84] : memref<16x16xf32, #tpu.memory_space<vmem>>, vector<16x16xf32>
    %cst_85 = arith.constant dense<0.000000e+00> : vector<16x16xf32>
    %168 = tpu.matmul %164, %165, %cst_85 {dimension_numbers = #tpu.dot_dimension_numbers<[1], [1], [0], [0], [0, 0, 1, 0], [], []>} : vector<16x4xf32>, vector<16x4xf32>, vector<16x16xf32> -> vector<16x16xf32>
    %169 = arith.addf %168, %167 : vector<16x16xf32>
    %cst_86 = arith.constant dense<0xFF800000> : vector<16xf32>
    %170 = vector.multi_reduction <maximumf>, %169, %cst_86 [1] : vector<16x16xf32> to vector<16xf32>
    %171 = vector.shape_cast %170 : vector<16xf32> to vector<16x1xf32>
    %172 = vector.broadcast %171 : vector<16x1xf32> to vector<16x16xf32>
    %173 = arith.subf %169, %172 : vector<16x16xf32>
    %174 = math.exp %173 : vector<16x16xf32>
    %cst_87 = arith.constant dense<0.000000e+00> : vector<16xf32>
    %175 = vector.multi_reduction <add>, %174, %cst_87 [1] : vector<16x16xf32> to vector<16xf32>
    %176 = vector.shape_cast %175 : vector<16xf32> to vector<16x1xf32>
    %177 = tpu.reciprocal %176 {approx = true} : vector<16x1xf32> -> vector<16x1xf32>
    %178 = vector.broadcast %177 : vector<16x1xf32> to vector<16x16xf32>
    %179 = arith.mulf %174, %178 : vector<16x16xf32>
    %cst_88 = arith.constant dense<0.000000e+00> : vector<16x4xf32>
    %180 = tpu.matmul %179, %166, %cst_88 {dimension_numbers = #tpu.dot_dimension_numbers<[1], [0], [0], [1], [0, 0, 1, 1], [], []>} : vector<16x16xf32>, vector<16x4xf32>, vector<16x4xf32> -> vector<16x4xf32>
    %181 = vector.extract_strided_slice %143 {offsets = [16, 4], sizes = [36, 4], strides = [1, 1]} : vector<52x8xf32> to vector<36x4xf32>
    %182 = vector.extract_strided_slice %144 {offsets = [0, 4], sizes = [52, 4], strides = [1, 1]} : vector<52x8xf32> to vector<52x4xf32>
    %183 = vector.extract_strided_slice %145 {offsets = [0, 4], sizes = [52, 4], strides = [1, 1]} : vector<52x8xf32> to vector<52x4xf32>
    %c1_89 = arith.constant 1 : index
    %c0_90 = arith.constant 0 : index
    %c0_91 = arith.constant 0 : index
    %184 = vector.load %arg8[%c1_89, %c0_90, %c0_91] : memref<2x36x52xf32, #tpu.memory_space<vmem>>, vector<1x36x52xf32>
    %185 = vector.shape_cast %184 : vector<1x36x52xf32> to vector<36x52xf32>
    %cst_92 = arith.constant dense<0.000000e+00> : vector<36x52xf32>
    %186 = tpu.matmul %181, %182, %cst_92 {dimension_numbers = #tpu.dot_dimension_numbers<[1], [1], [0], [0], [0, 0, 1, 0], [], []>} : vector<36x4xf32>, vector<52x4xf32>, vector<36x52xf32> -> vector<36x52xf32>
    %187 = arith.addf %186, %185 : vector<36x52xf32>
    %cst_93 = arith.constant dense<0xFF800000> : vector<36xf32>
    %188 = vector.multi_reduction <maximumf>, %187, %cst_93 [1] : vector<36x52xf32> to vector<36xf32>
    %189 = vector.shape_cast %188 : vector<36xf32> to vector<36x1xf32>
    %190 = vector.broadcast %189 : vector<36x1xf32> to vector<36x52xf32>
    %191 = arith.subf %187, %190 : vector<36x52xf32>
    %192 = math.exp %191 : vector<36x52xf32>
    %cst_94 = arith.constant dense<0.000000e+00> : vector<36xf32>
    %193 = vector.multi_reduction <add>, %192, %cst_94 [1] : vector<36x52xf32> to vector<36xf32>
    %194 = vector.shape_cast %193 : vector<36xf32> to vector<36x1xf32>
    %195 = tpu.reciprocal %194 {approx = true} : vector<36x1xf32> -> vector<36x1xf32>
    %196 = vector.broadcast %195 : vector<36x1xf32> to vector<36x52xf32>
    %197 = arith.mulf %192, %196 : vector<36x52xf32>
    %cst_95 = arith.constant dense<0.000000e+00> : vector<36x4xf32>
    %198 = tpu.matmul %197, %183, %cst_95 {dimension_numbers = #tpu.dot_dimension_numbers<[1], [0], [0], [1], [0, 0, 1, 1], [], []>} : vector<36x52xf32>, vector<52x4xf32>, vector<36x4xf32> -> vector<36x4xf32>
    %199 = vector.extract_strided_slice %143 {offsets = [0, 4], sizes = [16, 4], strides = [1, 1]} : vector<52x8xf32> to vector<16x4xf32>
    %200 = vector.extract_strided_slice %144 {offsets = [0, 4], sizes = [16, 4], strides = [1, 1]} : vector<52x8xf32> to vector<16x4xf32>
    %201 = vector.extract_strided_slice %145 {offsets = [0, 4], sizes = [16, 4], strides = [1, 1]} : vector<52x8xf32> to vector<16x4xf32>
    %c0_96 = arith.constant 0 : index
    %c0_97 = arith.constant 0 : index
    %202 = vector.load %arg9[%c0_96, %c0_97] : memref<16x16xf32, #tpu.memory_space<vmem>>, vector<16x16xf32>
    %cst_98 = arith.constant dense<0.000000e+00> : vector<16x16xf32>
    %203 = tpu.matmul %199, %200, %cst_98 {dimension_numbers = #tpu.dot_dimension_numbers<[1], [1], [0], [0], [0, 0, 1, 0], [], []>} : vector<16x4xf32>, vector<16x4xf32>, vector<16x16xf32> -> vector<16x16xf32>
    %204 = arith.addf %203, %202 : vector<16x16xf32>
    %cst_99 = arith.constant dense<0xFF800000> : vector<16xf32>
    %205 = vector.multi_reduction <maximumf>, %204, %cst_99 [1] : vector<16x16xf32> to vector<16xf32>
    %206 = vector.shape_cast %205 : vector<16xf32> to vector<16x1xf32>
    %207 = vector.broadcast %206 : vector<16x1xf32> to vector<16x16xf32>
    %208 = arith.subf %204, %207 : vector<16x16xf32>
    %209 = math.exp %208 : vector<16x16xf32>
    %cst_100 = arith.constant dense<0.000000e+00> : vector<16xf32>
    %210 = vector.multi_reduction <add>, %209, %cst_100 [1] : vector<16x16xf32> to vector<16xf32>
    %211 = vector.shape_cast %210 : vector<16xf32> to vector<16x1xf32>
    %212 = tpu.reciprocal %211 {approx = true} : vector<16x1xf32> -> vector<16x1xf32>
    %213 = vector.broadcast %212 : vector<16x1xf32> to vector<16x16xf32>
    %214 = arith.mulf %209, %213 : vector<16x16xf32>
    %cst_101 = arith.constant dense<0.000000e+00> : vector<16x4xf32>
    %215 = tpu.matmul %214, %201, %cst_101 {dimension_numbers = #tpu.dot_dimension_numbers<[1], [0], [0], [1], [0, 0, 1, 1], [], []>} : vector<16x16xf32>, vector<16x4xf32>, vector<16x4xf32> -> vector<16x4xf32>
    %216 = tpu.concatenate %180, %215 in 1 : vector<16x4xf32>, vector<16x4xf32> -> vector<16x8xf32>
    %217 = tpu.concatenate %163, %198 in 1 : vector<36x4xf32>, vector<36x4xf32> -> vector<36x8xf32>
    %218 = tpu.concatenate %216, %217 in 0 : vector<16x8xf32>, vector<36x8xf32> -> vector<52x8xf32>
    %c0_102 = arith.constant 0 : index
    %c0_103 = arith.constant 0 : index
    %219 = vector.load %arg10[%c0_102, %c0_103] : memref<8x8xf32, #tpu.memory_space<vmem>>, vector<8x8xf32>
    %cst_104 = arith.constant dense<0.000000e+00> : vector<52x8xf32>
    %220 = tpu.matmul %218, %219, %cst_104 {dimension_numbers = #tpu.dot_dimension_numbers<[1], [0], [0], [1], [0, 0, 1, 1], [], []>} : vector<52x8xf32>, vector<8x8xf32>, vector<52x8xf32> -> vector<52x8xf32>
    %c0_105 = arith.constant 0 : index
    %c0_106 = arith.constant 0 : index
    %221 = vector.load %arg11[%c0_105, %c0_106] : memref<1x8xf32, #tpu.memory_space<vmem>>, vector<1x8xf32>
    %222 = vector.broadcast %221 : vector<1x8xf32> to vector<52x8xf32>
    %223 = arith.addf %220, %222 : vector<52x8xf32>
    %c0_107 = arith.constant 0 : index
    %c0_108 = arith.constant 0 : index
    %c0_109 = arith.constant 0 : index
    %224 = vector.load %arg12[%c0_107, %c0_108, %c0_109] : memref<1x52x8xf32, #tpu.memory_space<vmem>>, vector<1x52x8xf32>
    %225 = vector.shape_cast %224 : vector<1x52x8xf32> to vector<52x8xf32>
    %226 = vector.shape_cast %223 : vector<52x8xf32> to vector<1x52x8xf32>
    tpu.vector_store %arg12[%c0_107, %c0_108, %c0_109], %226 {strides = array<i32>} : memref<1x52x8xf32, #tpu.memory_space<vmem>>, vector<1x52x8xf32>,
    return
  }
  func.func @transform_0(%arg0: i32) -> (i32, i32, i32) {
    %c0_i32 = arith.constant 0 : i32
    %c0_i32_0 = arith.constant 0 : i32
    %c0_i32_1 = arith.constant 0 : i32
    return %arg0, %c0_i32, %c0_i32_0 : i32, i32, i32
  }
  func.func @transform_1(%arg0: i32) -> (i32, i32, i32) {
    %c0_i32 = arith.constant 0 : i32
    %c0_i32_0 = arith.constant 0 : i32
    %c0_i32_1 = arith.constant 0 : i32
    %c0_i32_2 = arith.constant 0 : i32
    return %c0_i32, %c0_i32_0, %c0_i32_1 : i32, i32, i32
  }
  func.func @transform_2(%arg0: i32) -> (i32, i32, i32) {
    %c0_i32 = arith.constant 0 : i32
    %c0_i32_0 = arith.constant 0 : i32
    %c0_i32_1 = arith.constant 0 : i32
    %c0_i32_2 = arith.constant 0 : i32
    return %c0_i32, %c0_i32_0, %c0_i32_1 : i32, i32, i32
  }
  func.func @transform_3(%arg0: i32) -> (i32, i32) {
    %c0_i32 = arith.constant 0 : i32
    %c0_i32_0 = arith.constant 0 : i32
    %c0_i32_1 = arith.constant 0 : i32
    return %c0_i32, %c0_i32_0 : i32, i32
  }
  func.func @transform_4(%arg0: i32) -> (i32, i32) {
    %c0_i32 = arith.constant 0 : i32
    %c0_i32_0 = arith.constant 0 : i32
    %c0_i32_1 = arith.constant 0 : i32
    return %c0_i32, %c0_i32_0 : i32, i32
  }
  func.func @transform_5(%arg0: i32) -> (i32, i32) {
    %c0_i32 = arith.constant 0 : i32
    %c0_i32_0 = arith.constant 0 : i32
    %c0_i32_1 = arith.constant 0 : i32
    return %c0_i32, %c0_i32_0 : i32, i32
  }
  func.func @transform_6(%arg0: i32) -> (i32, i32) {
    %c0_i32 = arith.constant 0 : i32
    %c0_i32_0 = arith.constant 0 : i32
    %c0_i32_1 = arith.constant 0 : i32
    return %c0_i32, %c0_i32_0 : i32, i32
  }
  func.func @transform_7(%arg0: i32) -> (i32, i32, i32) {
    %c0_i32 = arith.constant 0 : i32
    %c0_i32_0 = arith.constant 0 : i32
    %c0_i32_1 = arith.constant 0 : i32
    %c0_i32_2 = arith.constant 0 : i32
    return %c0_i32, %c0_i32_0, %c0_i32_1 : i32, i32, i32
  }
  func.func @transform_8(%arg0: i32) -> (i32, i32) {
    %c0_i32 = arith.constant 0 : i32
    %c0_i32_0 = arith.constant 0 : i32
    %c0_i32_1 = arith.constant 0 : i32
    return %c0_i32, %c0_i32_0 : i32, i32
  }
  func.func @transform_9(%arg0: i32) -> (i32, i32) {
    %c0_i32 = arith.constant 0 : i32
    %c0_i32_0 = arith.constant 0 : i32
    %c0_i32_1 = arith.constant 0 : i32
    return %c0_i32, %c0_i32_0 : i32, i32
  }
  func.func @transform_10(%arg0: i32) -> (i32, i32) {
    %c0_i32 = arith.constant 0 : i32
    %c0_i32_0 = arith.constant 0 : i32
    %c0_i32_1 = arith.constant 0 : i32
    return %c0_i32, %c0_i32_0 : i32, i32
  }
  func.func @transform_11(%arg0: i32) -> (i32, i32, i32) {
    %c0_i32 = arith.constant 0 : i32
    %c0_i32_0 = arith.constant 0 : i32
    %c0_i32_1 = arith.constant 0 : i32
    return %arg0, %c0_i32, %c0_i32_0 : i32, i32, i32
  }
}

</mosaic_0001>

<llo_original>
// kernel: split_attn_forward.1
$region0: #{split_attn_forward.1}
  #allocation0 [shape = 'u32[]', space=smem, size = 0x4, offset = 0x4, fixed_abs, tag = 'smem constant byte address 0x4 - core index']
  #allocation1 [shape = 'u32[72,128]{1,0:T(1,128)}', space=vmem, size = 0x9000, scoped, tag = 'internal scratch']
  %s0 = inlined_call_operand.vmem [shape: f32[2,52,8], index: 0, kind: input, shape index: {}]
  %s1 = inlined_call_operand.vmem [shape: f32[9,16,16], index: 1, kind: input, shape index: {}]
  %s2 = inlined_call_operand.vmem [shape: f32[9,36,36], index: 2, kind: input, shape index: {}]
  %s3 = inlined_call_operand.vmem [shape: f32[9,24], index: 3, kind: input, shape index: {}]
  %s4 = inlined_call_operand.vmem [shape: f32[1,24], index: 4, kind: input, shape index: {}]
  %s5 = inlined_call_operand.vmem [shape: f32[24,24], index: 5, kind: input, shape index: {}]
  %s6 = inlined_call_operand.vmem [shape: f32[1,24], index: 6, kind: input, shape index: {}]
  %s7 = inlined_call_operand.vmem [shape: f32[2,36,52], index: 7, kind: input, shape index: {}]
  %s8 = inlined_call_operand.vmem [shape: f32[16,16], index: 8, kind: input, shape index: {}]
  %s9 = inlined_call_operand.vmem [shape: f32[8,8], index: 9, kind: input, shape index: {}]
  %s10 = inlined_call_operand.vmem [shape: f32[1,8], index: 10, kind: input, shape index: {}]
  %s11 = inlined_call_operand.vmem [shape: f32[2,52,8], index: 11, kind: output, shape index: {}]
  %s12 = sld [smem:[#allocation0]]
  $region77: #{split_attn_forward.1} parent=0
    _
  %s14 = ssub.s32 1, %s12
  %s15 = scalar_select 0, %s14, %s12
  loop: start=0, step=1, limit=4
  $region2: #{split_attn_forward.1} parent=0 // loop_pre_header
    _
  $region3: #{split_attn_forward.1} parent=0 // loop_header
    %s17 = sphi 0, %s21
    %p18 = scmp.ge.s32.totalorder %s17, 4
    %s27 = sphi 0, %s29
    %s30 = sphi 0, %s27
    %s31 = sphi 0, %s30
    %s47 = sphi 0, %s31
    %s51 = sphi 0, %s51
    %s53 = sphi 0, %s51
    %s54 = sphi 0, %s53
    %s68 = sphi 0, %s54
    %s72 = sphi 0, %s72
    %s74 = sphi 0, %s72
    %s75 = sphi 0, %s74
    %s89 = sphi 0, %s75
    %s93 = sphi 0, %s93
    %s95 = sphi 0, %s93
    %s96 = sphi 0, %s95
    %s110 = sphi 0, %s96
    %s114 = sphi 0, %s114
    %s116 = sphi 0, %s114
    %s117 = sphi 0, %s116
    %s131 = sphi 0, %s117
    %s135 = sphi 0, %s135
    %s137 = sphi 0, %s135
    %s138 = sphi 0, %s137
    %s152 = sphi 0, %s138
    %s156 = sphi 0, %s156
    %s158 = sphi 0, %s156
    %s159 = sphi 0, %s158
    %s173 = sphi 0, %s159
    %s177 = sphi 0, %s177
    %s179 = sphi 0, %s177
    %s180 = sphi 0, %s179
    %s194 = sphi 0, %s180
    %s198 = sphi 0, %s198
    %s200 = sphi 0, %s198
    %s201 = sphi 0, %s200
    %s215 = sphi 0, %s201
    %s219 = sphi 0, %s219
    %s221 = sphi 0, %s219
    %s222 = sphi 0, %s221
    %s236 = sphi 0, %s222
    %s240 = sphi 0, %s240
    %s242 = sphi 0, %s240
    %s243 = sphi 0, %s242
    %s257 = sphi 0, %s243
    %s263 = sphi 0, %s265
    %s266 = sphi 0, %s263
    %s267 = sphi 0, %s266
    %s283 = sphi 0, %s267
  $region4: #{split_attn_forward.1} parent=0 // loop_header_branch
    %20 = sbr.rel (%p18) target = $region8
  $region5: #{split_attn_forward.1} parent=0 // loop_body
    %s22 = ssub.s32 %s17, 1
    %s23 = ssub.s32 %s17, 2
    %s24 = sadd.s32 %s17, 1
    %s25 = ssub.s32 %s17, %s24
    %p26 = scmp.eq.s32.totalorder %s25, 0
    %s28 = sadd.s32 %s27, 1
    %s29 = scalar_select %p26, %s27, %s28
    %p32 = pneg %p26
    %p33 = scmp.eq.s32.totalorder %s17, 1
    %p34 = por %p32, %p33
    %p35 = scmp.ne.s32.totalorder %s27, %s30
    %p36 = scmp.eq.s32.totalorder %s17, 0
    %p37 = por %p35, %p36
    %p38 = scmp.ne.s32.totalorder %s27, %s30
    %p39 = scmp.eq.s32.totalorder %s22, 1
    %p40 = por %p38, %p39
    %p41 = scmp.ne.s32.totalorder %s30, %s31
    %p42 = scmp.eq.s32.totalorder %s22, 0
    %p43 = por %p41, %p42
    %p44 = scmp.ne.s32.totalorder %s30, %s31
    %p45 = scmp.eq.s32.totalorder %s23, 1
    %p46 = por %p44, %p45
    %p48 = scmp.ne.s32.totalorder %s31, %s47
    %p49 = scmp.eq.s32.totalorder %s23, 0
    %p50 = por %p48, %p49
    %s52 = sadd.s32 %s51, 1
    %p55 = scmp.eq.s32.totalorder %s17, 1
    %p56 = scmp.ne.s32.totalorder %s51, %s53
    %p57 = scmp.eq.s32.totalorder %s17, 0
    %p58 = por %p56, %p57
    %p59 = scmp.ne.s32.totalorder %s51, %s53
    %p60 = scmp.eq.s32.totalorder %s22, 1
    %p61 = por %p59, %p60
    %p62 = scmp.ne.s32.totalorder %s53, %s54
    %p63 = scmp.eq.s32.totalorder %s22, 0
    %p64 = por %p62, %p63
    %p65 = scmp.ne.s32.totalorder %s53, %s54
    %p66 = scmp.eq.s32.totalorder %s23, 1
    %p67 = por %p65, %p66
    %p69 = scmp.ne.s32.totalorder %s54, %s68
    %p70 = scmp.eq.s32.totalorder %s23, 0
    %p71 = por %p69, %p70
    %s73 = sadd.s32 %s72, 1
    %p76 = scmp.eq.s32.totalorder %s17, 1
    %p77 = scmp.ne.s32.totalorder %s72, %s74
    %p78 = scmp.eq.s32.totalorder %s17, 0
    %p79 = por %p77, %p78
    %p80 = scmp.ne.s32.totalorder %s72, %s74
    %p81 = scmp.eq.s32.totalorder %s22, 1
    %p82 = por %p80, %p81
    %p83 = scmp.ne.s32.totalorder %s74, %s75
    %p84 = scmp.eq.s32.totalorder %s22, 0
    %p85 = por %p83, %p84
    %p86 = scmp.ne.s32.totalorder %s74, %s75
    %p87 = scmp.eq.s32.totalorder %s23, 1
    %p88 = por %p86, %p87
    %p90 = scmp.ne.s32.totalorder %s75, %s89
    %p91 = scmp.eq.s32.totalorder %s23, 0
    %p92 = por %p90, %p91
    %s94 = sadd.s32 %s93, 1
    %p97 = scmp.eq.s32.totalorder %s17, 1
    %p98 = scmp.ne.s32.totalorder %s93, %s95
    %p99 = scmp.eq.s32.totalorder %s17, 0
    %p100 = por %p98, %p99
    %p101 = scmp.ne.s32.totalorder %s93, %s95
    %p102 = scmp.eq.s32.totalorder %s22, 1
    %p103 = por %p101, %p102
    %p104 = scmp.ne.s32.totalorder %s95, %s96
    %p105 = scmp.eq.s32.totalorder %s22, 0
    %p106 = por %p104, %p105
    %p107 = scmp.ne.s32.totalorder %s95, %s96
    %p108 = scmp.eq.s32.totalorder %s23, 1
    %p109 = por %p107, %p108
    %p111 = scmp.ne.s32.totalorder %s96, %s110
    %p112 = scmp.eq.s32.totalorder %s23, 0
    %p113 = por %p111, %p112
    %s115 = sadd.s32 %s114, 1
    %p118 = scmp.eq.s32.totalorder %s17, 1
    %p119 = scmp.ne.s32.totalorder %s114, %s116
    %p120 = scmp.eq.s32.totalorder %s17, 0
    %p121 = por %p119, %p120
    %p122 = scmp.ne.s32.totalorder %s114, %s116
    %p123 = scmp.eq.s32.totalorder %s22, 1
    %p124 = por %p122, %p123
    %p125 = scmp.ne.s32.totalorder %s116, %s117
    %p126 = scmp.eq.s32.totalorder %s22, 0
    %p127 = por %p125, %p126
    %p128 = scmp.ne.s32.totalorder %s116, %s117
    %p129 = scmp.eq.s32.totalorder %s23, 1
    %p130 = por %p128, %p129
    %p132 = scmp.ne.s32.totalorder %s117, %s131
    %p133 = scmp.eq.s32.totalorder %s23, 0
    %p134 = por %p132, %p133
    %s136 = sadd.s32 %s135, 1
    %p139 = scmp.eq.s32.totalorder %s17, 1
    %p140 = scmp.ne.s32.totalorder %s135, %s137
    %p141 = scmp.eq.s32.totalorder %s17, 0
    %p142 = por %p140, %p141
    %p143 = scmp.ne.s32.totalorder %s135, %s137
    %p144 = scmp.eq.s32.totalorder %s22, 1
    %p145 = por %p143, %p144
    %p146 = scmp.ne.s32.totalorder %s137, %s138
    %p147 = scmp.eq.s32.totalorder %s22, 0
    %p148 = por %p146, %p147
    %p149 = scmp.ne.s32.totalorder %s137, %s138
    %p150 = scmp.eq.s32.totalorder %s23, 1
    %p151 = por %p149, %p150
    %p153 = scmp.ne.s32.totalorder %s138, %s152
    %p154 = scmp.eq.s32.totalorder %s23, 0
    %p155 = por %p153, %p154
    %s157 = sadd.s32 %s156, 1
    %p160 = scmp.eq.s32.totalorder %s17, 1
    %p161 = scmp.ne.s32.totalorder %s156, %s158
    %p162 = scmp.eq.s32.totalorder %s17, 0
    %p163 = por %p161, %p162
    %p164 = scmp.ne.s32.totalorder %s156, %s158
    %p165 = scmp.eq.s32.totalorder %s22, 1
    %p166 = por %p164, %p165
    %p167 = scmp.ne.s32.totalorder %s158, %s159
    %p168 = scmp.eq.s32.totalorder %s22, 0
    %p169 = por %p167, %p168
    %p170 = scmp.ne.s32.totalorder %s158, %s159
    %p171 = scmp.eq.s32.totalorder %s23, 1
    %p172 = por %p170, %p171
    %p174 = scmp.ne.s32.totalorder %s159, %s173
    %p175 = scmp.eq.s32.totalorder %s23, 0
    %p176 = por %p174, %p175
    %s178 = sadd.s32 %s177, 1
    %p181 = scmp.eq.s32.totalorder %s17, 1
    %p182 = scmp.ne.s32.totalorder %s177, %s179
    %p183 = scmp.eq.s32.totalorder %s17, 0
    %p184 = por %p182, %p183
    %p185 = scmp.ne.s32.totalorder %s177, %s179
    %p186 = scmp.eq.s32.totalorder %s22, 1
    %p187 = por %p185, %p186
    %p188 = scmp.ne.s32.totalorder %s179, %s180
    %p189 = scmp.eq.s32.totalorder %s22, 0
    %p190 = por %p188, %p189
    %p191 = scmp.ne.s32.totalorder %s179, %s180
    %p192 = scmp.eq.s32.totalorder %s23, 1
    %p193 = por %p191, %p192
    %p195 = scmp.ne.s32.totalorder %s180, %s194
    %p196 = scmp.eq.s32.totalorder %s23, 0
    %p197 = por %p195, %p196
    %s199 = sadd.s32 %s198, 1
    %p202 = scmp.eq.s32.totalorder %s17, 1
    %p203 = scmp.ne.s32.totalorder %s198, %s200
    %p204 = scmp.eq.s32.totalorder %s17, 0
    %p205 = por %p203, %p204
    %p206 = scmp.ne.s32.totalorder %s198, %s200
    %p207 = scmp.eq.s32.totalorder %s22, 1
    %p208 = por %p206, %p207
    %p209 = scmp.ne.s32.totalorder %s200, %s201
    %p210 = scmp.eq.s32.totalorder %s22, 0
    %p211 = por %p209, %p210
    %p212 = scmp.ne.s32.totalorder %s200, %s201
    %p213 = scmp.eq.s32.totalorder %s23, 1
    %p214 = por %p212, %p213
    %p216 = scmp.ne.s32.totalorder %s201, %s215
    %p217 = scmp.eq.s32.totalorder %s23, 0
    %p218 = por %p216, %p217
    %s220 = sadd.s32 %s219, 1
    %p223 = scmp.eq.s32.totalorder %s17, 1
    %p224 = scmp.ne.s32.totalorder %s219, %s221
    %p225 = scmp.eq.s32.totalorder %s17, 0
    %p226 = por %p224, %p225
    %p227 = scmp.ne.s32.totalorder %s219, %s221
    %p228 = scmp.eq.s32.totalorder %s22, 1
    %p229 = por %p227, %p228
    %p230 = scmp.ne.s32.totalorder %s221, %s222
    %p231 = scmp.eq.s32.totalorder %s22, 0
    %p232 = por %p230, %p231
    %p233 = scmp.ne.s32.totalorder %s221, %s222
    %p234 = scmp.eq.s32.totalorder %s23, 1
    %p235 = por %p233, %p234
    %p237 = scmp.ne.s32.totalorder %s222, %s236
    %p238 = scmp.eq.s32.totalorder %s23, 0
    %p239 = por %p237, %p238
    %s241 = sadd.s32 %s240, 1
    %p244 = scmp.eq.s32.totalorder %s17, 1
    %p245 = scmp.ne.s32.totalorder %s240, %s242
    %p246 = scmp.eq.s32.totalorder %s17, 0
    %p247 = por %p245, %p246
    %p248 = scmp.ne.s32.totalorder %s240, %s242
    %p249 = scmp.eq.s32.totalorder %s22, 1
    %p250 = por %p248, %p249
    %p251 = scmp.ne.s32.totalorder %s242, %s243
    %p252 = scmp.eq.s32.totalorder %s22, 0
    %p253 = por %p251, %p252
    %p254 = scmp.ne.s32.totalorder %s242, %s243
    %p255 = scmp.eq.s32.totalorder %s23, 1
    %p256 = por %p254, %p255
    %p258 = scmp.ne.s32.totalorder %s243, %s257
    %p259 = scmp.eq.s32.totalorder %s23, 0
    %p260 = por %p258, %p259
    %s261 = ssub.s32 %s17, %s24
    %p262 = scmp.eq.s32.totalorder %s261, 0
    %s264 = sadd.s32 %s263, 1
    %s265 = scalar_select %p262, %s263, %s264
    %p268 = pneg %p262
    %p269 = scmp.eq.s32.totalorder %s17, 1
    %p270 = por %p268, %p269
    %p271 = scmp.ne.s32.totalorder %s263, %s266
    %p272 = scmp.eq.s32.totalorder %s17, 0
    %p273 = por %p271, %p272
    %p274 = scmp.ne.s32.totalorder %s263, %s266
    %p275 = scmp.eq.s32.totalorder %s22, 1
    %p276 = por %p274, %p275
    %p277 = scmp.ne.s32.totalorder %s266, %s267
    %p278 = scmp.eq.s32.totalorder %s22, 0
    %p279 = por %p277, %p278
    %p280 = scmp.ne.s32.totalorder %s266, %s267
    %p281 = scmp.eq.s32.totalorder %s23, 1
    %p282 = por %p280, %p281
    %p284 = scmp.ne.s32.totalorder %s267, %s283
    %p285 = scmp.eq.s32.totalorder %s23, 0
    %p286 = por %p284, %p285
    %p287 = scmp.le.s32.totalorder 1, %s17
    %p288 = scmp.lt.s32.totalorder %s17, 3
    %p289 = pnand %p287, %p288
    %p290 = pneg %p289
    // Predicated region
    $region9: #{split_attn_forward.1} parent=5 // pred_check
      _
    $region10: #{split_attn_forward.1} parent=5 // pred_check_branch
      %292 = sbr.rel (%p289) target = $region12
    $region11: #{split_attn_forward.1} parent=5 // pred_region
      %s293 = ssub.s32 %s17, 1
      // Predicated region
      $region13: #{split_attn_forward.1} parent=11 // pred_check
        %p294 = pneg %p64
      $region14: #{split_attn_forward.1} parent=11 // pred_check_branch
        %296 = sbr.rel (%p294) target = $region16
      $region15: #{split_attn_forward.1} parent=11 // pred_region
        _
      $region16: #{split_attn_forward.1} parent=11 // pred_fallthru
        _
      // Predicated region
      $region17: #{split_attn_forward.1} parent=11 // pred_check
        %p297 = pneg %p85
      $region18: #{split_attn_forward.1} parent=11 // pred_check_branch
        %299 = sbr.rel (%p297) target = $region20
      $region19: #{split_attn_forward.1} parent=11 // pred_region
        _
      $region20: #{split_attn_forward.1} parent=11 // pred_fallthru
        _
      // Predicated region
      $region21: #{split_attn_forward.1} parent=11 // pred_check
        %p300 = pneg %p106
      $region22: #{split_attn_forward.1} parent=11 // pred_check_branch
        %302 = sbr.rel (%p300) target = $region24
      $region23: #{split_attn_forward.1} parent=11 // pred_region
        _
      $region24: #{split_attn_forward.1} parent=11 // pred_fallthru
        _
      // Predicated region
      $region25: #{split_attn_forward.1} parent=11 // pred_check
        %p303 = pneg %p127
      $region26: #{split_attn_forward.1} parent=11 // pred_check_branch
        %305 = sbr.rel (%p303) target = $region28
      $region27: #{split_attn_forward.1} parent=11 // pred_region
        _
      $region28: #{split_attn_forward.1} parent=11 // pred_fallthru
        _
      // Predicated region
      $region29: #{split_attn_forward.1} parent=11 // pred_check
        %p306 = pneg %p148
      $region30: #{split_attn_forward.1} parent=11 // pred_check_branch
        %308 = sbr.rel (%p306) target = $region32
      $region31: #{split_attn_forward.1} parent=11 // pred_region
        _
      $region32: #{split_attn_forward.1} parent=11 // pred_fallthru
        _
      // Predicated region
      $region33: #{split_attn_forward.1} parent=11 // pred_check
        %p309 = pneg %p169
      $region34: #{split_attn_forward.1} parent=11 // pred_check_branch
        %311 = sbr.rel (%p309) target = $region36
      $region35: #{split_attn_forward.1} parent=11 // pred_region
        _
      $region36: #{split_attn_forward.1} parent=11 // pred_fallthru
        _
      // Predicated region
      $region37: #{split_attn_forward.1} parent=11 // pred_check
        %p312 = pneg %p190
      $region38: #{split_attn_forward.1} parent=11 // pred_check_branch
        %314 = sbr.rel (%p312) target = $region40
      $region39: #{split_attn_forward.1} parent=11 // pred_region
        _
      $region40: #{split_attn_forward.1} parent=11 // pred_fallthru
        _
      // Predicated region
      $region41: #{split_attn_forward.1} parent=11 // pred_check
        %p315 = pneg %p211
      $region42: #{split_attn_forward.1} parent=11 // pred_check_branch
        %317 = sbr.rel (%p315) target = $region44
      $region43: #{split_attn_forward.1} parent=11 // pred_region
        _
      $region44: #{split_attn_forward.1} parent=11 // pred_fallthru
        _
      // Predicated region
      $region45: #{split_attn_forward.1} parent=11 // pred_check
        %p318 = pneg %p232
      $region46: #{split_attn_forward.1} parent=11 // pred_check_branch
        %320 = sbr.rel (%p318) target = $region48
      $region47: #{split_attn_forward.1} parent=11 // pred_region
        _
      $region48: #{split_attn_forward.1} parent=11 // pred_fallthru
        _
      // Predicated region
      $region49: #{split_attn_forward.1} parent=11 // pred_check
        %p321 = pneg %p253
      $region50: #{split_attn_forward.1} parent=11 // pred_check_branch
        %323 = sbr.rel (%p321) target = $region52
      $region51: #{split_attn_forward.1} parent=11 // pred_region
        _
      $region52: #{split_attn_forward.1} parent=11 // pred_fallthru
        _
    $region12: #{split_attn_forward.1} parent=5 // pred_fallthru
      _
    %p324 = scmp.lt.s32.totalorder %s17, 2
    // Predicated region
    $region53: #{split_attn_forward.1} parent=5 // pred_check
      %p325 = pneg %p324
    $region54: #{split_attn_forward.1} parent=5 // pred_check_branch
      %327 = sbr.rel (%p325) target = $region56
    $region55: #{split_attn_forward.1} parent=5 // pred_region
      // Predicated region
      $region57: #{split_attn_forward.1} parent=55 // pred_check
        %p328 = pneg %p37
      $region58: #{split_attn_forward.1} parent=55 // pred_check_branch
        %330 = sbr.rel (%p328) target = $region60
      $region59: #{split_attn_forward.1} parent=55 // pred_region
        %p331 = scmp.lt.s32.totalorder %s17, 1
        %s332 = scalar_select %p331, %s17, 1
        %s333 = smul.addr %s332, 7
        %s334 = smul.addr %s333, 8
        %s335 = scalar_lea.vmem %s0, %s334
      $region60: #{split_attn_forward.1} parent=55 // pred_fallthru
        _
    $region56: #{split_attn_forward.1} parent=5 // pred_fallthru
      _
    %p336 = scmp.le.s32.totalorder 1, %s17
    %p337 = scmp.lt.s32.totalorder %s17, 3
    %p338 = pnand %p336, %p337
    %p339 = pneg %p338
    // Predicated region
    $region61: #{split_attn_forward.1} parent=5 // pred_check
      _
    $region62: #{split_attn_forward.1} parent=5 // pred_check_branch
      %341 = sbr.rel (%p338) target = $region64
    $region63: #{split_attn_forward.1} parent=5 // pred_region
      %s342 = ssub.s32 %s17, 1
      %p343 = scmp.lt.s32.totalorder %s22, 1
      %s344 = scalar_select %p343, %s22, 1
      %s345 = smul.addr %s344, 7
      %s346 = smul.addr %s345, 8
      %s347 = scalar_lea.vmem %s0, %s346
      %p348 = pneg %p43
      %p349 = pneg %p40
      %p350 = pneg %p64
      %p351 = pneg %p61
      %p352 = pneg %p85
      %p353 = pneg %p82
      %p354 = pneg %p106
      %p355 = pneg %p103
      %p356 = pneg %p127
      %p357 = pneg %p124
      %p358 = pneg %p148
      %p359 = pneg %p145
      %p360 = pneg %p169
      %p361 = pneg %p166
      %p362 = pneg %p190
      %p363 = pneg %p187
      %p364 = pneg %p211
      %p365 = pneg %p208
      %p366 = pneg %p232
      %p367 = pneg %p229
      %p368 = pneg %p253
      %p369 = pneg %p250
      %p370 = pneg %p279
      %p371 = pneg %p276
      %p372 = scmp.lt.s32.totalorder %s22, 1
      %s373 = scalar_select %p372, %s22, 1
      %s374 = smul.addr %s373, 7
      %s375 = smul.addr %s374, 8
      %s376 = scalar_lea.vmem %s11, %s375
      %p377 = scmp.lt.s32.totalorder %s22, 1
      %s378 = scalar_select %p377, %s22, 1
      %s379 = smul.addr %s378, 7
      %s380 = smul.addr %s379, 8
      %s381 = scalar_lea.vmem %s0, %s380
      %p382 = scmp.lt.s32.totalorder %s22, 1
      %s383 = scalar_select %p382, %s22, 1
      %s384 = smul.addr %s383, 7
      %s385 = smul.addr %s384, 8
      %s386 = scalar_lea.vmem %s11, %s385
      %v387 = vld [vmem:[%s381] sm:$0xff]
      %v388 = vld [vmem:[%s381 + $0x8] sm:$0xff]
      %v389 = vld [vmem:[%s381 + $0x10] sm:$0xff]
      %v390 = vld [vmem:[%s381 + $0x18] sm:$0xff]
      %v391 = vld [vmem:[%s381 + $0x20] sm:$0xff]
      %v392 = vld [vmem:[%s381 + $0x28] sm:$0xff]
      %v393 = vld [vmem:[%s381 + $0x30] sm:$0xf]
      %401 = vrot.lane.b32.xlu0 %v387, 8
      %v402 = vpop.permute.xlu0 %401
      %403 = vrot.lane.b32.xlu0 %v388, 8
      %v404 = vpop.permute.xlu0 %403
      %405 = vrot.lane.b32.xlu0 %v389, 8
      %v406 = vpop.permute.xlu0 %405
      %407 = vrot.lane.b32.xlu0 %v390, 8
      %v408 = vpop.permute.xlu0 %407
      %409 = vrot.lane.b32.xlu0 %v391, 8
      %v410 = vpop.permute.xlu0 %409
      %411 = vrot.lane.b32.xlu0 %v392, 8
      %v412 = vpop.permute.xlu0 %411
      %413 = vrot.lane.b32.xlu0 %v393, 8
      %v414 = vpop.permute.xlu0 %413
      %422 = vrot.lane.b32.xlu0 %v387, 16
      %v423 = vpop.permute.xlu0 %422
      %424 = vrot.lane.b32.xlu0 %v388, 16
      %v425 = vpop.permute.xlu0 %424
      %426 = vrot.lane.b32.xlu0 %v389, 16
      %v427 = vpop.permute.xlu0 %426
      %428 = vrot.lane.b32.xlu0 %v390, 16
      %v429 = vpop.permute.xlu0 %428
      %430 = vrot.lane.b32.xlu0 %v391, 16
      %v431 = vpop.permute.xlu0 %430
      %432 = vrot.lane.b32.xlu0 %v392, 16
      %v433 = vpop.permute.xlu0 %432
      %434 = vrot.lane.b32.xlu0 %v393, 16
      %v435 = vpop.permute.xlu0 %434
      %vm443 = vcmask 64512
      %v444 = vsel %vm443, %v387, %v402
      %v445 = vsel %vm443, %v388, %v404
      %v446 = vsel %vm443, %v389, %v406
      %v447 = vsel %vm443, %v390, %v408
      %v448 = vsel %vm443, %v391, %v410
      %v449 = vsel %vm443, %v392, %v412
      %v450 = vsel %vm443, %v393, %v414
      %vm451 = vcmask 130048
      %v452 = vsel %vm451, %v444, %v423
      %v453 = vsel %vm451, %v445, %v425
      %v454 = vsel %vm451, %v446, %v427
      %v455 = vsel %vm451, %v447, %v429
      %v456 = vsel %vm451, %v448, %v431
      %v457 = vsel %vm451, %v449, %v433
      %v458 = vsel %vm451, %v450, %v435
      %v459 = vld [vmem:[%s3] sm:$0xff]
      %v460 = vld [vmem:[%s3 + $0x8] sm:$0x1]
      %v461 = vld [vmem:[%s1] sm:$0xff]
      %v462 = vld [vmem:[%s1 + $0x8] sm:$0xff]
      %v464 = vsel %vm451, %v461, 0
      %v467 = vsel %vm451, %v462, 0
      %469 = vmatpush.msra.mxu0 0.0
      %470 = vmatpush.msra.mxu0 0.0
      %471 = vmatpush.msra.mxu0 0.0
      %472 = vmatpush.msra.mxu0 0.0
      %473 = vmatpush.msra.mxu0 0.0
      %474 = vmatpush.msra.mxu0 0.0
      %475 = vmatpush.msra.mxu0 0.0
      %476 = vmatpush.msra.mxu0 0.0
      %477 = vmatpush.msra.mxu0 0.0
      %478 = vmatpush.msra.mxu0 0.0
      %479 = vmatpush.msra.mxu0 0.0
      %480 = vmatpush.msra.mxu0 0.0
      %481 = vmatpush.msra.mxu0 0.0
      %482 = vmatpush.msra.mxu0 0.0
      %483 = vmatpush.msra.mxu0 %v453
      %484 = vmatpush.msra.mxu0 %v452
      %485 = vmatmul.f32.gmra.mxu0 %v464
      %v486 = vpop.f32.mrf.mxu0
      %v487 = vadd.f32 0.0, %v486
      %488 = vmatmul.f32.gmra.mxu0 %v467
      %v489 = vpop.f32.mrf.mxu0
      %v490 = vadd.f32 0.0, %v489
      %491 = vdwg.mxu0
      %v492 = vperm.slane %v459, 0
      %v493 = vmul.f32 %v487, %v492
      %v494 = vmul.f32 %v490, %v492
      %v495 = vadd.f32 %v493, 0.0
      %v496 = vadd.f32 %v494, 0.0
      %s497 = scalar_lea.vmem %s1, 16
      %v498 = vld [vmem:[%s497] sm:$0xff]
      %v499 = vld [vmem:[%s497 + $0x8] sm:$0xff]
      %v501 = vsel %vm451, %v498, 0
      %v504 = vsel %vm451, %v499, 0
      %506 = vmatpush.msra.mxu0 0.0
      %507 = vmatpush.msra.mxu0 0.0
      %508 = vmatpush.msra.mxu0 0.0
      %509 = vmatpush.msra.mxu0 0.0
      %510 = vmatpush.msra.mxu0 0.0
      %511 = vmatpush.msra.mxu0 0.0
      %512 = vmatpush.msra.mxu0 0.0
      %513 = vmatpush.msra.mxu0 0.0
      %514 = vmatpush.msra.mxu0 0.0
      %515 = vmatpush.msra.mxu0 0.0
      %516 = vmatpush.msra.mxu0 0.0
      %517 = vmatpush.msra.mxu0 0.0
      %518 = vmatpush.msra.mxu0 0.0
      %519 = vmatpush.msra.mxu0 0.0
      %520 = vmatpush.msra.mxu0 %v453
      %521 = vmatpush.msra.mxu0 %v452
      %522 = vmatmul.f32.gmra.mxu0 %v501
      %v523 = vpop.f32.mrf.mxu0
      %v524 = vadd.f32 0.0, %v523
      %525 = vmatmul.f32.gmra.mxu0 %v504
      %v526 = vpop.f32.mrf.mxu0
      %v527 = vadd.f32 0.0, %v526
      %528 = vdwg.mxu0
      %v529 = vperm.slane %v459, 1
      %v530 = vmul.f32 %v524, %v529
      %v531 = vmul.f32 %v527, %v529
      %v532 = vadd.f32 %v495, %v530
      %v533 = vadd.f32 %v496, %v531
      %s534 = scalar_lea.vmem %s1, 32
      %v535 = vld [vmem:[%s534] sm:$0xff]
      %v536 = vld [vmem:[%s534 + $0x8] sm:$0xff]
      %v538 = vsel %vm451, %v535, 0
      %v541 = vsel %vm451, %v536, 0
      %543 = vmatpush.msra.mxu0 0.0
      %544 = vmatpush.msra.mxu0 0.0
      %545 = vmatpush.msra.mxu0 0.0
      %546 = vmatpush.msra.mxu0 0.0
      %547 = vmatpush.msra.mxu0 0.0
      %548 = vmatpush.msra.mxu0 0.0
      %549 = vmatpush.msra.mxu0 0.0
      %550 = vmatpush.msra.mxu0 0.0
      %551 = vmatpush.msra.mxu0 0.0
      %552 = vmatpush.msra.mxu0 0.0
      %553 = vmatpush.msra.mxu0 0.0
      %554 = vmatpush.msra.mxu0 0.0
      %555 = vmatpush.msra.mxu0 0.0
      %556 = vmatpush.msra.mxu0 0.0
      %557 = vmatpush.msra.mxu0 %v453
      %558 = vmatpush.msra.mxu0 %v452
      %559 = vmatmul.f32.gmra.mxu0 %v538
      %v560 = vpop.f32.mrf.mxu0
      %v561 = vadd.f32 0.0, %v560
      %562 = vmatmul.f32.gmra.mxu0 %v541
      %v563 = vpop.f32.mrf.mxu0
      %v564 = vadd.f32 0.0, %v563
      %565 = vdwg.mxu0
      %v566 = vperm.slane %v459, 2
      %v567 = vmul.f32 %v561, %v566
      %v568 = vmul.f32 %v564, %v566
      %v569 = vadd.f32 %v532, %v567
      %v570 = vadd.f32 %v533, %v568
      %s571 = scalar_lea.vmem %s1, 48
      %v572 = vld [vmem:[%s571] sm:$0xff]
      %v573 = vld [vmem:[%s571 + $0x8] sm:$0xff]
      %v575 = vsel %vm451, %v572, 0
      %v578 = vsel %vm451, %v573, 0
      %580 = vmatpush.msra.mxu0 0.0
      %581 = vmatpush.msra.mxu0 0.0
      %582 = vmatpush.msra.mxu0 0.0
      %583 = vmatpush.msra.mxu0 0.0
      %584 = vmatpush.msra.mxu0 0.0
      %585 = vmatpush.msra.mxu0 0.0
      %586 = vmatpush.msra.mxu0 0.0
      %587 = vmatpush.msra.mxu0 0.0
      %588 = vmatpush.msra.mxu0 0.0
      %589 = vmatpush.msra.mxu0 0.0
      %590 = vmatpush.msra.mxu0 0.0
      %591 = vmatpush.msra.mxu0 0.0
      %592 = vmatpush.msra.mxu0 0.0
      %593 = vmatpush.msra.mxu0 0.0
      %594 = vmatpush.msra.mxu0 %v453
      %595 = vmatpush.msra.mxu0 %v452
      %596 = vmatmul.f32.gmra.mxu0 %v575
      %v597 = vpop.f32.mrf.mxu0
      %v598 = vadd.f32 0.0, %v597
      %599 = vmatmul.f32.gmra.mxu0 %v578
      %v600 = vpop.f32.mrf.mxu0
      %v601 = vadd.f32 0.0, %v600
      %602 = vdwg.mxu0
      %v603 = vperm.slane %v459, 3
      %v604 = vmul.f32 %v598, %v603
      %v605 = vmul.f32 %v601, %v603
      %v606 = vadd.f32 %v569, %v604
      %v607 = vadd.f32 %v570, %v605
      %s608 = scalar_lea.vmem %s1, 64
      %v609 = vld [vmem:[%s608] sm:$0xff]
      %v610 = vld [vmem:[%s608 + $0x8] sm:$0xff]
      %v612 = vsel %vm451, %v609, 0
      %v615 = vsel %vm451, %v610, 0
      %617 = vmatpush.msra.mxu0 0.0
      %618 = vmatpush.msra.mxu0 0.0
      %619 = vmatpush.msra.mxu0 0.0
      %620 = vmatpush.msra.mxu0 0.0
      %621 = vmatpush.msra.mxu0 0.0
      %622 = vmatpush.msra.mxu0 0.0
      %623 = vmatpush.msra.mxu0 0.0
      %624 = vmatpush.msra.mxu0 0.0
      %625 = vmatpush.msra.mxu0 0.0
      %626 = vmatpush.msra.mxu0 0.0
      %627 = vmatpush.msra.mxu0 0.0
      %628 = vmatpush.msra.mxu0 0.0
      %629 = vmatpush.msra.mxu0 0.0
      %630 = vmatpush.msra.mxu0 0.0
      %631 = vmatpush.msra.mxu0 %v453
      %632 = vmatpush.msra.mxu0 %v452
      %633 = vmatmul.f32.gmra.mxu0 %v612
      %v634 = vpop.f32.mrf.mxu0
      %v635 = vadd.f32 0.0, %v634
      %636 = vmatmul.f32.gmra.mxu0 %v615
      %v637 = vpop.f32.mrf.mxu0
      %v638 = vadd.f32 0.0, %v637
      %639 = vdwg.mxu0
      %v640 = vperm.slane %v459, 4
      %v641 = vmul.f32 %v635, %v640
      %v642 = vmul.f32 %v638, %v640
      %v643 = vadd.f32 %v606, %v641
      %v644 = vadd.f32 %v607, %v642
      %s645 = scalar_lea.vmem %s1, 80
      %v646 = vld [vmem:[%s645] sm:$0xff]
      %v647 = vld [vmem:[%s645 + $0x8] sm:$0xff]
      %v649 = vsel %vm451, %v646, 0
      %v652 = vsel %vm451, %v647, 0
      %654 = vmatpush.msra.mxu0 0.0
      %655 = vmatpush.msra.mxu0 0.0
      %656 = vmatpush.msra.mxu0 0.0
      %657 = vmatpush.msra.mxu0 0.0
      %658 = vmatpush.msra.mxu0 0.0
      %659 = vmatpush.msra.mxu0 0.0
      %660 = vmatpush.msra.mxu0 0.0
      %661 = vmatpush.msra.mxu0 0.0
      %662 = vmatpush.msra.mxu0 0.0
      %663 = vmatpush.msra.mxu0 0.0
      %664 = vmatpush.msra.mxu0 0.0
      %665 = vmatpush.msra.mxu0 0.0
      %666 = vmatpush.msra.mxu0 0.0
      %667 = vmatpush.msra.mxu0 0.0
      %668 = vmatpush.msra.mxu0 %v453
      %669 = vmatpush.msra.mxu0 %v452
      %670 = vmatmul.f32.gmra.mxu0 %v649
      %v671 = vpop.f32.mrf.mxu0
      %v672 = vadd.f32 0.0, %v671
      %673 = vmatmul.f32.gmra.mxu0 %v652
      %v674 = vpop.f32.mrf.mxu0
      %v675 = vadd.f32 0.0, %v674
      %676 = vdwg.mxu0
      %v677 = vperm.slane %v459, 5
      %v678 = vmul.f32 %v672, %v677
      %v679 = vmul.f32 %v675, %v677
      %v680 = vadd.f32 %v643, %v678
      %v681 = vadd.f32 %v644, %v679
      %s682 = scalar_lea.vmem %s1, 96
      %v683 = vld [vmem:[%s682] sm:$0xff]
      %v684 = vld [vmem:[%s682 + $0x8] sm:$0xff]
      %v686 = vsel %vm451, %v683, 0
      %v689 = vsel %vm451, %v684, 0
      %691 = vmatpush.msra.mxu0 0.0
      %692 = vmatpush.msra.mxu0 0.0
      %693 = vmatpush.msra.mxu0 0.0
      %694 = vmatpush.msra.mxu0 0.0
      %695 = vmatpush.msra.mxu0 0.0
      %696 = vmatpush.msra.mxu0 0.0
      %697 = vmatpush.msra.mxu0 0.0
      %698 = vmatpush.msra.mxu0 0.0
      %699 = vmatpush.msra.mxu0 0.0
      %700 = vmatpush.msra.mxu0 0.0
      %701 = vmatpush.msra.mxu0 0.0
      %702 = vmatpush.msra.mxu0 0.0
      %703 = vmatpush.msra.mxu0 0.0
      %704 = vmatpush.msra.mxu0 0.0
      %705 = vmatpush.msra.mxu0 %v453
      %706 = vmatpush.msra.mxu0 %v452
      %707 = vmatmul.f32.gmra.mxu0 %v686
      %v708 = vpop.f32.mrf.mxu0
      %v709 = vadd.f32 0.0, %v708
      %710 = vmatmul.f32.gmra.mxu0 %v689
      %v711 = vpop.f32.mrf.mxu0
      %v712 = vadd.f32 0.0, %v711
      %713 = vdwg.mxu0
      %v714 = vperm.slane %v459, 6
      %v715 = vmul.f32 %v709, %v714
      %v716 = vmul.f32 %v712, %v714
      %v717 = vadd.f32 %v680, %v715
      %v718 = vadd.f32 %v681, %v716
      %s719 = scalar_lea.vmem %s1, 112
      %v720 = vld [vmem:[%s719] sm:$0xff]
      %v721 = vld [vmem:[%s719 + $0x8] sm:$0xff]
      %v723 = vsel %vm451, %v720, 0
      %v726 = vsel %vm451, %v721, 0
      %728 = vmatpush.msra.mxu0 0.0
      %729 = vmatpush.msra.mxu0 0.0
      %730 = vmatpush.msra.mxu0 0.0
      %731 = vmatpush.msra.mxu0 0.0
      %732 = vmatpush.msra.mxu0 0.0
      %733 = vmatpush.msra.mxu0 0.0
      %734 = vmatpush.msra.mxu0 0.0
      %735 = vmatpush.msra.mxu0 0.0
      %736 = vmatpush.msra.mxu0 0.0
      %737 = vmatpush.msra.mxu0 0.0
      %738 = vmatpush.msra.mxu0 0.0
      %739 = vmatpush.msra.mxu0 0.0
      %740 = vmatpush.msra.mxu0 0.0
      %741 = vmatpush.msra.mxu0 0.0
      %742 = vmatpush.msra.mxu0 %v453
      %743 = vmatpush.msra.mxu0 %v452
      %744 = vmatmul.f32.gmra.mxu0 %v723
      %v745 = vpop.f32.mrf.mxu0
      %v746 = vadd.f32 0.0, %v745
      %747 = vmatmul.f32.gmra.mxu0 %v726
      %v748 = vpop.f32.mrf.mxu0
      %v749 = vadd.f32 0.0, %v748
      %750 = vdwg.mxu0
      %v751 = vperm.slane %v459, 7
      %v752 = vmul.f32 %v746, %v751
      %v753 = vmul.f32 %v749, %v751
      %v754 = vadd.f32 %v717, %v752
      %v755 = vadd.f32 %v718, %v753
      %s756 = scalar_lea.vmem %s1, 128
      %v757 = vld [vmem:[%s756] sm:$0xff]
      %v758 = vld [vmem:[%s756 + $0x8] sm:$0xff]
      %v760 = vsel %vm451, %v757, 0
      %v763 = vsel %vm451, %v758, 0
      %765 = vmatpush.msra.mxu0 0.0
      %766 = vmatpush.msra.mxu0 0.0
      %767 = vmatpush.msra.mxu0 0.0
      %768 = vmatpush.msra.mxu0 0.0
      %769 = vmatpush.msra.mxu0 0.0
      %770 = vmatpush.msra.mxu0 0.0
      %771 = vmatpush.msra.mxu0 0.0
      %772 = vmatpush.msra.mxu0 0.0
      %773 = vmatpush.msra.mxu0 0.0
      %774 = vmatpush.msra.mxu0 0.0
      %775 = vmatpush.msra.mxu0 0.0
      %776 = vmatpush.msra.mxu0 0.0
      %777 = vmatpush.msra.mxu0 0.0
      %778 = vmatpush.msra.mxu0 0.0
      %779 = vmatpush.msra.mxu0 %v453
      %780 = vmatpush.msra.mxu0 %v452
      %781 = vmatmul.f32.gmra.mxu0 %v760
      %v782 = vpop.f32.mrf.mxu0
      %v783 = vadd.f32 0.0, %v782
      %784 = vmatmul.f32.gmra.mxu0 %v763
      %v785 = vpop.f32.mrf.mxu0
      %v786 = vadd.f32 0.0, %v785
      %787 = vdwg.mxu0
      %v788 = vperm.slane %v460, 0
      %v789 = vmul.f32 %v783, %v788
      %v790 = vmul.f32 %v786, %v788
      %v791 = vadd.f32 %v754, %v789
      %v792 = vadd.f32 %v755, %v790
      %v793 = vld [vmem:[%s2] sm:$0xff]
      %v794 = vld [vmem:[%s2 + $0x8] sm:$0xff]
      %v795 = vld [vmem:[%s2 + $0x10] sm:$0xff]
      %v796 = vld [vmem:[%s2 + $0x18] sm:$0xff]
      %v797 = vld [vmem:[%s2 + $0x20] sm:$0xf]
      %vm798 = vcmask 293888
      %v800 = vsel %vm798, %v793, 0
      %v803 = vsel %vm798, %v794, 0
      %v806 = vsel %vm798, %v795, 0
      %v809 = vsel %vm798, %v796, 0
      %v812 = vsel %vm798, %v797, 0
      %vm814 = vcmask 1043456
      %v816 = vsel %vm814, %v458, 0
      %818 = vmatpush.msra.mxu0 0.0
      %819 = vmatpush.msra.mxu0 0.0
      %820 = vmatpush.msra.mxu0 0.0
      %821 = vmatpush.msra.mxu0 0.0
      %822 = vmatpush.msra.mxu0 0.0
      %823 = vmatpush.msra.mxu0 0.0
      %824 = vmatpush.msra.mxu0 0.0
      %825 = vmatpush.msra.mxu0 0.0
      %826 = vmatpush.msra.mxu0 0.0
      %827 = vmatpush.msra.mxu0 0.0
      %828 = vmatpush.msra.mxu0 0.0
      %829 = vmatpush.msra.mxu0 %v816
      %830 = vmatpush.msra.mxu0 %v457
      %831 = vmatpush.msra.mxu0 %v456
      %832 = vmatpush.msra.mxu0 %v455
      %833 = vmatpush.msra.mxu0 %v454
      %834 = vmatmul.f32.gmra.mxu0 %v800
      %v835 = vpop.f32.mrf.mxu0
      %v836 = vadd.f32 0.0, %v835
      %837 = vmatmul.f32.gmra.mxu0 %v803
      %v838 = vpop.f32.mrf.mxu0
      %v839 = vadd.f32 0.0, %v838
      %840 = vmatmul.f32.gmra.mxu0 %v806
      %v841 = vpop.f32.mrf.mxu0
      %v842 = vadd.f32 0.0, %v841
      %843 = vmatmul.f32.gmra.mxu0 %v809
      %v844 = vpop.f32.mrf.mxu0
      %v845 = vadd.f32 0.0, %v844
      %846 = vmatmul.f32.gmra.mxu0 %v812
      %v847 = vpop.f32.mrf.mxu0
      %v848 = vadd.f32 0.0, %v847
      %849 = vdwg.mxu0
      %v850 = vmul.f32 %v836, %v492
      %v851 = vmul.f32 %v839, %v492
      %v852 = vmul.f32 %v842, %v492
      %v853 = vmul.f32 %v845, %v492
      %v854 = vmul.f32 %v848, %v492
      %v855 = vadd.f32 %v850, 0.0
      %v856 = vadd.f32 %v851, 0.0
      %v857 = vadd.f32 %v852, 0.0
      %v858 = vadd.f32 %v853, 0.0
      %v859 = vadd.f32 %v854, 0.0
      %s860 = scalar_lea.vmem %s2, 40
      %v861 = vld [vmem:[%s860] sm:$0xff]
      %v862 = vld [vmem:[%s860 + $0x8] sm:$0xff]
      %v863 = vld [vmem:[%s860 + $0x10] sm:$0xff]
      %v864 = vld [vmem:[%s860 + $0x18] sm:$0xff]
      %v865 = vld [vmem:[%s860 + $0x20] sm:$0xf]
      %v867 = vsel %vm798, %v861, 0
      %v870 = vsel %vm798, %v862, 0
      %v873 = vsel %vm798, %v863, 0
      %v876 = vsel %vm798, %v864, 0
      %v879 = vsel %vm798, %v865, 0
      %881 = vmatpush.msra.mxu0 0.0
      %882 = vmatpush.msra.mxu0 0.0
      %883 = vmatpush.msra.mxu0 0.0
      %884 = vmatpush.msra.mxu0 0.0
      %885 = vmatpush.msra.mxu0 0.0
      %886 = vmatpush.msra.mxu0 0.0
      %887 = vmatpush.msra.mxu0 0.0
      %888 = vmatpush.msra.mxu0 0.0
      %889 = vmatpush.msra.mxu0 0.0
      %890 = vmatpush.msra.mxu0 0.0
      %891 = vmatpush.msra.mxu0 0.0
      %892 = vmatpush.msra.mxu0 %v816
      %893 = vmatpush.msra.mxu0 %v457
      %894 = vmatpush.msra.mxu0 %v456
      %895 = vmatpush.msra.mxu0 %v455
      %896 = vmatpush.msra.mxu0 %v454
      %897 = vmatmul.f32.gmra.mxu0 %v867
      %v898 = vpop.f32.mrf.mxu0
      %v899 = vadd.f32 0.0, %v898
      %900 = vmatmul.f32.gmra.mxu0 %v870
      %v901 = vpop.f32.mrf.mxu0
      %v902 = vadd.f32 0.0, %v901
      %903 = vmatmul.f32.gmra.mxu0 %v873
      %v904 = vpop.f32.mrf.mxu0
      %v905 = vadd.f32 0.0, %v904
      %906 = vmatmul.f32.gmra.mxu0 %v876
      %v907 = vpop.f32.mrf.mxu0
      %v908 = vadd.f32 0.0, %v907
      %909 = vmatmul.f32.gmra.mxu0 %v879
      %v910 = vpop.f32.mrf.mxu0
      %v911 = vadd.f32 0.0, %v910
      %912 = vdwg.mxu0
      %v913 = vmul.f32 %v899, %v529
      %v914 = vmul.f32 %v902, %v529
      %v915 = vmul.f32 %v905, %v529
      %v916 = vmul.f32 %v908, %v529
      %v917 = vmul.f32 %v911, %v529
      %v918 = vadd.f32 %v855, %v913
      %v919 = vadd.f32 %v856, %v914
      %v920 = vadd.f32 %v857, %v915
      %v921 = vadd.f32 %v858, %v916
      %v922 = vadd.f32 %v859, %v917
      %s923 = scalar_lea.vmem %s2, 80
      %v924 = vld [vmem:[%s923] sm:$0xff]
      %v925 = vld [vmem:[%s923 + $0x8] sm:$0xff]
      %v926 = vld [vmem:[%s923 + $0x10] sm:$0xff]
      %v927 = vld [vmem:[%s923 + $0x18] sm:$0xff]
      %v928 = vld [vmem:[%s923 + $0x20] sm:$0xf]
      %v930 = vsel %vm798, %v924, 0
      %v933 = vsel %vm798, %v925, 0
      %v936 = vsel %vm798, %v926, 0
      %v939 = vsel %vm798, %v927, 0
      %v942 = vsel %vm798, %v928, 0
      %944 = vmatpush.msra.mxu0 0.0
      %945 = vmatpush.msra.mxu0 0.0
      %946 = vmatpush.msra.mxu0 0.0
      %947 = vmatpush.msra.mxu0 0.0
      %948 = vmatpush.msra.mxu0 0.0
      %949 = vmatpush.msra.mxu0 0.0
      %950 = vmatpush.msra.mxu0 0.0
      %951 = vmatpush.msra.mxu0 0.0
      %952 = vmatpush.msra.mxu0 0.0
      %953 = vmatpush.msra.mxu0 0.0
      %954 = vmatpush.msra.mxu0 0.0
      %955 = vmatpush.msra.mxu0 %v816
      %956 = vmatpush.msra.mxu0 %v457
      %957 = vmatpush.msra.mxu0 %v456
      %958 = vmatpush.msra.mxu0 %v455
      %959 = vmatpush.msra.mxu0 %v454
      %960 = vmatmul.f32.gmra.mxu0 %v930
      %v961 = vpop.f32.mrf.mxu0
      %v962 = vadd.f32 0.0, %v961
      %963 = vmatmul.f32.gmra.mxu0 %v933
      %v964 = vpop.f32.mrf.mxu0
      %v965 = vadd.f32 0.0, %v964
      %966 = vmatmul.f32.gmra.mxu0 %v936
      %v967 = vpop.f32.mrf.mxu0
      %v968 = vadd.f32 0.0, %v967
      %969 = vmatmul.f32.gmra.mxu0 %v939
      %v970 = vpop.f32.mrf.mxu0
      %v971 = vadd.f32 0.0, %v970
      %972 = vmatmul.f32.gmra.mxu0 %v942
      %v973 = vpop.f32.mrf.mxu0
      %v974 = vadd.f32 0.0, %v973
      %975 = vdwg.mxu0
      %v976 = vmul.f32 %v962, %v566
      %v977 = vmul.f32 %v965, %v566
      %v978 = vmul.f32 %v968, %v566
      %v979 = vmul.f32 %v971, %v566
      %v980 = vmul.f32 %v974, %v566
      %v981 = vadd.f32 %v918, %v976
      %v982 = vadd.f32 %v919, %v977
      %v983 = vadd.f32 %v920, %v978
      %v984 = vadd.f32 %v921, %v979
      %v985 = vadd.f32 %v922, %v980
      %s986 = scalar_lea.vmem %s2, 120
      %v987 = vld [vmem:[%s986] sm:$0xff]
      %v988 = vld [vmem:[%s986 + $0x8] sm:$0xff]
      %v989 = vld [vmem:[%s986 + $0x10] sm:$0xff]
      %v990 = vld [vmem:[%s986 + $0x18] sm:$0xff]
      %v991 = vld [vmem:[%s986 + $0x20] sm:$0xf]
      %v993 = vsel %vm798, %v987, 0
      %v996 = vsel %vm798, %v988, 0
      %v999 = vsel %vm798, %v989, 0
      %v1002 = vsel %vm798, %v990, 0
      %v1005 = vsel %vm798, %v991, 0
      %1007 = vmatpush.msra.mxu0 0.0
      %1008 = vmatpush.msra.mxu0 0.0
      %1009 = vmatpush.msra.mxu0 0.0
      %1010 = vmatpush.msra.mxu0 0.0
      %1011 = vmatpush.msra.mxu0 0.0
      %1012 = vmatpush.msra.mxu0 0.0
      %1013 = vmatpush.msra.mxu0 0.0
      %1014 = vmatpush.msra.mxu0 0.0
      %1015 = vmatpush.msra.mxu0 0.0
      %1016 = vmatpush.msra.mxu0 0.0
      %1017 = vmatpush.msra.mxu0 0.0
      %1018 = vmatpush.msra.mxu0 %v816
      %1019 = vmatpush.msra.mxu0 %v457
      %1020 = vmatpush.msra.mxu0 %v456
      %1021 = vmatpush.msra.mxu0 %v455
      %1022 = vmatpush.msra.mxu0 %v454
      %1023 = vmatmul.f32.gmra.mxu0 %v993
      %v1024 = vpop.f32.mrf.mxu0
      %v1025 = vadd.f32 0.0, %v1024
      %1026 = vmatmul.f32.gmra.mxu0 %v996
      %v1027 = vpop.f32.mrf.mxu0
      %v1028 = vadd.f32 0.0, %v1027
      %1029 = vmatmul.f32.gmra.mxu0 %v999
      %v1030 = vpop.f32.mrf.mxu0
      %v1031 = vadd.f32 0.0, %v1030
      %1032 = vmatmul.f32.gmra.mxu0 %v1002
      %v1033 = vpop.f32.mrf.mxu0
      %v1034 = vadd.f32 0.0, %v1033
      %1035 = vmatmul.f32.gmra.mxu0 %v1005
      %v1036 = vpop.f32.mrf.mxu0
      %v1037 = vadd.f32 0.0, %v1036
      %1038 = vdwg.mxu0
      %v1039 = vmul.f32 %v1025, %v603
      %v1040 = vmul.f32 %v1028, %v603
      %v1041 = vmul.f32 %v1031, %v603
      %v1042 = vmul.f32 %v1034, %v603
      %v1043 = vmul.f32 %v1037, %v603
      %v1044 = vadd.f32 %v981, %v1039
      %v1045 = vadd.f32 %v982, %v1040
      %v1046 = vadd.f32 %v983, %v1041
      %v1047 = vadd.f32 %v984, %v1042
      %v1048 = vadd.f32 %v985, %v1043
      %s1049 = scalar_lea.vmem %s2, 160
      %v1050 = vld [vmem:[%s1049] sm:$0xff]
      %v1051 = vld [vmem:[%s1049 + $0x8] sm:$0xff]
      %v1052 = vld [vmem:[%s1049 + $0x10] sm:$0xff]
      %v1053 = vld [vmem:[%s1049 + $0x18] sm:$0xff]
      %v1054 = vld [vmem:[%s1049 + $0x20] sm:$0xf]
      %v1056 = vsel %vm798, %v1050, 0
      %v1059 = vsel %vm798, %v1051, 0
      %v1062 = vsel %vm798, %v1052, 0
      %v1065 = vsel %vm798, %v1053, 0
      %v1068 = vsel %vm798, %v1054, 0
      %1070 = vmatpush.msra.mxu0 0.0
      %1071 = vmatpush.msra.mxu0 0.0
      %1072 = vmatpush.msra.mxu0 0.0
      %1073 = vmatpush.msra.mxu0 0.0
      %1074 = vmatpush.msra.mxu0 0.0
      %1075 = vmatpush.msra.mxu0 0.0
      %1076 = vmatpush.msra.mxu0 0.0
      %1077 = vmatpush.msra.mxu0 0.0
      %1078 = vmatpush.msra.mxu0 0.0
      %1079 = vmatpush.msra.mxu0 0.0
      %1080 = vmatpush.msra.mxu0 0.0
      %1081 = vmatpush.msra.mxu0 %v816
      %1082 = vmatpush.msra.mxu0 %v457
      %1083 = vmatpush.msra.mxu0 %v456
      %1084 = vmatpush.msra.mxu0 %v455
      %1085 = vmatpush.msra.mxu0 %v454
      %1086 = vmatmul.f32.gmra.mxu0 %v1056
      %v1087 = vpop.f32.mrf.mxu0
      %v1088 = vadd.f32 0.0, %v1087
      %1089 = vmatmul.f32.gmra.mxu0 %v1059
      %v1090 = vpop.f32.mrf.mxu0
      %v1091 = vadd.f32 0.0, %v1090
      %1092 = vmatmul.f32.gmra.mxu0 %v1062
      %v1093 = vpop.f32.mrf.mxu0
      %v1094 = vadd.f32 0.0, %v1093
      %1095 = vmatmul.f32.gmra.mxu0 %v1065
      %v1096 = vpop.f32.mrf.mxu0
      %v1097 = vadd.f32 0.0, %v1096
      %1098 = vmatmul.f32.gmra.mxu0 %v1068
      %v1099 = vpop.f32.mrf.mxu0
      %v1100 = vadd.f32 0.0, %v1099
      %1101 = vdwg.mxu0
      %v1102 = vmul.f32 %v1088, %v640
      %v1103 = vmul.f32 %v1091, %v640
      %v1104 = vmul.f32 %v1094, %v640
      %v1105 = vmul.f32 %v1097, %v640
      %v1106 = vmul.f32 %v1100, %v640
      %v1107 = vadd.f32 %v1044, %v1102
      %v1108 = vadd.f32 %v1045, %v1103
      %v1109 = vadd.f32 %v1046, %v1104
      %v1110 = vadd.f32 %v1047, %v1105
      %v1111 = vadd.f32 %v1048, %v1106
      %s1112 = scalar_lea.vmem %s2, 200
      %v1113 = vld [vmem:[%s1112] sm:$0xff]
      %v1114 = vld [vmem:[%s1112 + $0x8] sm:$0xff]
      %v1115 = vld [vmem:[%s1112 + $0x10] sm:$0xff]
      %v1116 = vld [vmem:[%s1112 + $0x18] sm:$0xff]
      %v1117 = vld [vmem:[%s1112 + $0x20] sm:$0xf]
      %v1119 = vsel %vm798, %v1113, 0
      %v1122 = vsel %vm798, %v1114, 0
      %v1125 = vsel %vm798, %v1115, 0
      %v1128 = vsel %vm798, %v1116, 0
      %v1131 = vsel %vm798, %v1117, 0
      %1133 = vmatpush.msra.mxu0 0.0
      %1134 = vmatpush.msra.mxu0 0.0
      %1135 = vmatpush.msra.mxu0 0.0
      %1136 = vmatpush.msra.mxu0 0.0
      %1137 = vmatpush.msra.mxu0 0.0
      %1138 = vmatpush.msra.mxu0 0.0
      %1139 = vmatpush.msra.mxu0 0.0
      %1140 = vmatpush.msra.mxu0 0.0
      %1141 = vmatpush.msra.mxu0 0.0
      %1142 = vmatpush.msra.mxu0 0.0
      %1143 = vmatpush.msra.mxu0 0.0
      %1144 = vmatpush.msra.mxu0 %v816
      %1145 = vmatpush.msra.mxu0 %v457
      %1146 = vmatpush.msra.mxu0 %v456
      %1147 = vmatpush.msra.mxu0 %v455
      %1148 = vmatpush.msra.mxu0 %v454
      %1149 = vmatmul.f32.gmra.mxu0 %v1119
      %v1150 = vpop.f32.mrf.mxu0
      %v1151 = vadd.f32 0.0, %v1150
      %1152 = vmatmul.f32.gmra.mxu0 %v1122
      %v1153 = vpop.f32.mrf.mxu0
      %v1154 = vadd.f32 0.0, %v1153
      %1155 = vmatmul.f32.gmra.mxu0 %v1125
      %v1156 = vpop.f32.mrf.mxu0
      %v1157 = vadd.f32 0.0, %v1156
      %1158 = vmatmul.f32.gmra.mxu0 %v1128
      %v1159 = vpop.f32.mrf.mxu0
      %v1160 = vadd.f32 0.0, %v1159
      %1161 = vmatmul.f32.gmra.mxu0 %v1131
      %v1162 = vpop.f32.mrf.mxu0
      %v1163 = vadd.f32 0.0, %v1162
      %1164 = vdwg.mxu0
      %v1165 = vmul.f32 %v1151, %v677
      %v1166 = vmul.f32 %v1154, %v677
      %v1167 = vmul.f32 %v1157, %v677
      %v1168 = vmul.f32 %v1160, %v677
      %v1169 = vmul.f32 %v1163, %v677
      %v1170 = vadd.f32 %v1107, %v1165
      %v1171 = vadd.f32 %v1108, %v1166
      %v1172 = vadd.f32 %v1109, %v1167
      %v1173 = vadd.f32 %v1110, %v1168
      %v1174 = vadd.f32 %v1111, %v1169
      %s1175 = scalar_lea.vmem %s2, 240
      %v1176 = vld [vmem:[%s1175] sm:$0xff]
      %v1177 = vld [vmem:[%s1175 + $0x8] sm:$0xff]
      %v1178 = vld [vmem:[%s1175 + $0x10] sm:$0xff]
      %v1179 = vld [vmem:[%s1175 + $0x18] sm:$0xff]
      %v1180 = vld [vmem:[%s1175 + $0x20] sm:$0xf]
      %v1182 = vsel %vm798, %v1176, 0
      %v1185 = vsel %vm798, %v1177, 0
      %v1188 = vsel %vm798, %v1178, 0
      %v1191 = vsel %vm798, %v1179, 0
      %v1194 = vsel %vm798, %v1180, 0
      %1196 = vmatpush.msra.mxu0 0.0
      %1197 = vmatpush.msra.mxu0 0.0
      %1198 = vmatpush.msra.mxu0 0.0
      %1199 = vmatpush.msra.mxu0 0.0
      %1200 = vmatpush.msra.mxu0 0.0
      %1201 = vmatpush.msra.mxu0 0.0
      %1202 = vmatpush.msra.mxu0 0.0
      %1203 = vmatpush.msra.mxu0 0.0
      %1204 = vmatpush.msra.mxu0 0.0
      %1205 = vmatpush.msra.mxu0 0.0
      %1206 = vmatpush.msra.mxu0 0.0
      %1207 = vmatpush.msra.mxu0 %v816
      %1208 = vmatpush.msra.mxu0 %v457
      %1209 = vmatpush.msra.mxu0 %v456
      %1210 = vmatpush.msra.mxu0 %v455
      %1211 = vmatpush.msra.mxu0 %v454
      %1212 = vmatmul.f32.gmra.mxu0 %v1182
      %v1213 = vpop.f32.mrf.mxu0
      %v1214 = vadd.f32 0.0, %v1213
      %1215 = vmatmul.f32.gmra.mxu0 %v1185
      %v1216 = vpop.f32.mrf.mxu0
      %v1217 = vadd.f32 0.0, %v1216
      %1218 = vmatmul.f32.gmra.mxu0 %v1188
      %v1219 = vpop.f32.mrf.mxu0
      %v1220 = vadd.f32 0.0, %v1219
      %1221 = vmatmul.f32.gmra.mxu0 %v1191
      %v1222 = vpop.f32.mrf.mxu0
      %v1223 = vadd.f32 0.0, %v1222
      %1224 = vmatmul.f32.gmra.mxu0 %v1194
      %v1225 = vpop.f32.mrf.mxu0
      %v1226 = vadd.f32 0.0, %v1225
      %1227 = vdwg.mxu0
      %v1228 = vmul.f32 %v1214, %v714
      %v1229 = vmul.f32 %v1217, %v714
      %v1230 = vmul.f32 %v1220, %v714
      %v1231 = vmul.f32 %v1223, %v714
      %v1232 = vmul.f32 %v1226, %v714
      %v1233 = vadd.f32 %v1170, %v1228
      %v1234 = vadd.f32 %v1171, %v1229
      %v1235 = vadd.f32 %v1172, %v1230
      %v1236 = vadd.f32 %v1173, %v1231
      %v1237 = vadd.f32 %v1174, %v1232
      %s1238 = scalar_lea.vmem %s2, 280
      %v1239 = vld [vmem:[%s1238] sm:$0xff]
      %v1240 = vld [vmem:[%s1238 + $0x8] sm:$0xff]
      %v1241 = vld [vmem:[%s1238 + $0x10] sm:$0xff]
      %v1242 = vld [vmem:[%s1238 + $0x18] sm:$0xff]
      %v1243 = vld [vmem:[%s1238 + $0x20] sm:$0xf]
      %v1245 = vsel %vm798, %v1239, 0
      %v1248 = vsel %vm798, %v1240, 0
      %v1251 = vsel %vm798, %v1241, 0
      %v1254 = vsel %vm798, %v1242, 0
      %v1257 = vsel %vm798, %v1243, 0
      %1259 = vmatpush.msra.mxu0 0.0
      %1260 = vmatpush.msra.mxu0 0.0
      %1261 = vmatpush.msra.mxu0 0.0
      %1262 = vmatpush.msra.mxu0 0.0
      %1263 = vmatpush.msra.mxu0 0.0
      %1264 = vmatpush.msra.mxu0 0.0
      %1265 = vmatpush.msra.mxu0 0.0
      %1266 = vmatpush.msra.mxu0 0.0
      %1267 = vmatpush.msra.mxu0 0.0
      %1268 = vmatpush.msra.mxu0 0.0
      %1269 = vmatpush.msra.mxu0 0.0
      %1270 = vmatpush.msra.mxu0 %v816
      %1271 = vmatpush.msra.mxu0 %v457
      %1272 = vmatpush.msra.mxu0 %v456
      %1273 = vmatpush.msra.mxu0 %v455
      %1274 = vmatpush.msra.mxu0 %v454
      %1275 = vmatmul.f32.gmra.mxu0 %v1245
      %v1276 = vpop.f32.mrf.mxu0
      %v1277 = vadd.f32 0.0, %v1276
      %1278 = vmatmul.f32.gmra.mxu0 %v1248
      %v1279 = vpop.f32.mrf.mxu0
      %v1280 = vadd.f32 0.0, %v1279
      %1281 = vmatmul.f32.gmra.mxu0 %v1251
      %v1282 = vpop.f32.mrf.mxu0
      %v1283 = vadd.f32 0.0, %v1282
      %1284 = vmatmul.f32.gmra.mxu0 %v1254
      %v1285 = vpop.f32.mrf.mxu0
      %v1286 = vadd.f32 0.0, %v1285
      %1287 = vmatmul.f32.gmra.mxu0 %v1257
      %v1288 = vpop.f32.mrf.mxu0
      %v1289 = vadd.f32 0.0, %v1288
      %1290 = vdwg.mxu0
      %v1291 = vmul.f32 %v1277, %v751
      %v1292 = vmul.f32 %v1280, %v751
      %v1293 = vmul.f32 %v1283, %v751
      %v1294 = vmul.f32 %v1286, %v751
      %v1295 = vmul.f32 %v1289, %v751
      %v1296 = vadd.f32 %v1233, %v1291
      %v1297 = vadd.f32 %v1234, %v1292
      %v1298 = vadd.f32 %v1235, %v1293
      %v1299 = vadd.f32 %v1236, %v1294
      %v1300 = vadd.f32 %v1237, %v1295
      %s1301 = scalar_lea.vmem %s2, 320
      %v1302 = vld [vmem:[%s1301] sm:$0xff]
      %v1303 = vld [vmem:[%s1301 + $0x8] sm:$0xff]
      %v1304 = vld [vmem:[%s1301 + $0x10] sm:$0xff]
      %v1305 = vld [vmem:[%s1301 + $0x18] sm:$0xff]
      %v1306 = vld [vmem:[%s1301 + $0x20] sm:$0xf]
      %v1308 = vsel %vm798, %v1302, 0
      %v1311 = vsel %vm798, %v1303, 0
      %v1314 = vsel %vm798, %v1304, 0
      %v1317 = vsel %vm798, %v1305, 0
      %v1320 = vsel %vm798, %v1306, 0
      %1322 = vmatpush.msra.mxu0 0.0
      %1323 = vmatpush.msra.mxu0 0.0
      %1324 = vmatpush.msra.mxu0 0.0
      %1325 = vmatpush.msra.mxu0 0.0
      %1326 = vmatpush.msra.mxu0 0.0
      %1327 = vmatpush.msra.mxu0 0.0
      %1328 = vmatpush.msra.mxu0 0.0
      %1329 = vmatpush.msra.mxu0 0.0
      %1330 = vmatpush.msra.mxu0 0.0
      %1331 = vmatpush.msra.mxu0 0.0
      %1332 = vmatpush.msra.mxu0 0.0
      %1333 = vmatpush.msra.mxu0 %v816
      %1334 = vmatpush.msra.mxu0 %v457
      %1335 = vmatpush.msra.mxu0 %v456
      %1336 = vmatpush.msra.mxu0 %v455
      %1337 = vmatpush.msra.mxu0 %v454
      %1338 = vmatmul.f32.gmra.mxu0 %v1308
      %v1339 = vpop.f32.mrf.mxu0
      %v1340 = vadd.f32 0.0, %v1339
      %1341 = vmatmul.f32.gmra.mxu0 %v1311
      %v1342 = vpop.f32.mrf.mxu0
      %v1343 = vadd.f32 0.0, %v1342
      %1344 = vmatmul.f32.gmra.mxu0 %v1314
      %v1345 = vpop.f32.mrf.mxu0
      %v1346 = vadd.f32 0.0, %v1345
      %1347 = vmatmul.f32.gmra.mxu0 %v1317
      %v1348 = vpop.f32.mrf.mxu0
      %v1349 = vadd.f32 0.0, %v1348
      %1350 = vmatmul.f32.gmra.mxu0 %v1320
      %v1351 = vpop.f32.mrf.mxu0
      %v1352 = vadd.f32 0.0, %v1351
      %1353 = vdwg.mxu0
      %v1354 = vmul.f32 %v1340, %v788
      %v1355 = vmul.f32 %v1343, %v788
      %v1356 = vmul.f32 %v1346, %v788
      %v1357 = vmul.f32 %v1349, %v788
      %v1358 = vmul.f32 %v1352, %v788
      %v1359 = vadd.f32 %v1296, %v1354
      %v1360 = vadd.f32 %v1297, %v1355
      %v1361 = vadd.f32 %v1298, %v1356
      %v1362 = vadd.f32 %v1299, %v1357
      %v1363 = vadd.f32 %v1300, %v1358
      %v1364 = vld [vmem:[%s4] sm:$0x1]
      %v1366 = vperm.slane %v1364, 0
      %v1368 = vadd.f32 %v791, %v1366
      %v1369 = vadd.f32 %v792, %v1366
      %v1370 = vadd.f32 %v1359, %v1366
      %v1371 = vadd.f32 %v1360, %v1366
      %v1372 = vadd.f32 %v1361, %v1366
      %v1373 = vadd.f32 %v1362, %v1366
      %v1374 = vadd.f32 %v1363, %v1366
      %v1375 = vld [vmem:[%s5] sm:$0xff]
      %v1376 = vld [vmem:[%s5 + $0x8] sm:$0xff]
      %v1377 = vld [vmem:[%s5 + $0x10] sm:$0xff]
      %v1378 = vld [vmem:[%s6] sm:$0x1]
      %v1380 = vperm.slane %v1378, 0
      %vm1382 = vcmask 195584
      %v1384 = vsel %vm1382, %v1368, 0
      %v1387 = vsel %vm1382, %v1369, 0
      %v1390 = vsel %vm1382, %v1370, 0
      %v1393 = vsel %vm1382, %v1371, 0
      %v1396 = vsel %vm1382, %v1372, 0
      %v1399 = vsel %vm1382, %v1373, 0
      %v1402 = vsel %vm1382, %v1374, 0
      %1404 = vmatpush.msra.mxu0 0.0
      %1405 = vmatpush.msra.mxu0 0.0
      %1406 = vmatpush.msra.mxu0 0.0
      %1407 = vmatpush.msra.mxu0 0.0
      %1408 = vmatpush.msra.mxu0 0.0
      %1409 = vmatpush.msra.mxu0 0.0
      %1410 = vmatpush.msra.mxu0 0.0
      %1411 = vmatpush.msra.mxu0 0.0
      %1412 = vmatpush.msra.mxu0 0.0
      %1413 = vmatpush.msra.mxu0 0.0
      %1414 = vmatpush.msra.mxu0 0.0
      %1415 = vmatpush.msra.mxu0 0.0
      %1416 = vmatpush.msra.mxu0 0.0
      %1417 = vmatpush.msra.mxu0 %v1377
      %1418 = vmatpush.msra.mxu0 %v1376
      %1419 = vmatpush.msra.mxu0 %v1375
      %1420 = vmatmul.f32.gmra.mxu0 %v1384
      %v1421 = vpop.f32.mrf.mxu0
      %v1422 = vadd.f32 %v1380, %v1421
      %1423 = vmatmul.f32.gmra.mxu0 %v1387
      %v1424 = vpop.f32.mrf.mxu0
      %v1425 = vadd.f32 %v1380, %v1424
      %1426 = vmatmul.f32.gmra.mxu0 %v1390
      %v1427 = vpop.f32.mrf.mxu0
      %v1428 = vadd.f32 %v1380, %v1427
      %1429 = vmatmul.f32.gmra.mxu0 %v1393
      %v1430 = vpop.f32.mrf.mxu0
      %v1431 = vadd.f32 %v1380, %v1430
      %1432 = vmatmul.f32.gmra.mxu0 %v1396
      %v1433 = vpop.f32.mrf.mxu0
      %v1434 = vadd.f32 %v1380, %v1433
      %1435 = vmatmul.f32.gmra.mxu0 %v1399
      %v1436 = vpop.f32.mrf.mxu0
      %v1437 = vadd.f32 %v1380, %v1436
      %1438 = vmatmul.f32.gmra.mxu0 %v1402
      %v1439 = vpop.f32.mrf.mxu0
      %v1440 = vadd.f32 %v1380, %v1439
      %1441 = vdwg.mxu0
      %v1442 = vld [vmem:[%s7] sm:$0xff]
      %v1443 = vld [vmem:[%s7 + $0x8] sm:$0xff]
      %v1444 = vld [vmem:[%s7 + $0x10] sm:$0xff]
      %v1445 = vld [vmem:[%s7 + $0x18] sm:$0xff]
      %v1446 = vld [vmem:[%s7 + $0x20] sm:$0xf]
      %1454 = vrot.lane.b32.xlu0 %v1422, 120
      %v1455 = vpop.permute.xlu0 %1454
      %1456 = vrot.lane.b32.xlu0 %v1425, 120
      %v1457 = vpop.permute.xlu0 %1456
      %1458 = vrot.lane.b32.xlu0 %v1428, 120
      %v1459 = vpop.permute.xlu0 %1458
      %1460 = vrot.lane.b32.xlu0 %v1431, 120
      %v1461 = vpop.permute.xlu0 %1460
      %1462 = vrot.lane.b32.xlu0 %v1434, 120
      %v1463 = vpop.permute.xlu0 %1462
      %1464 = vrot.lane.b32.xlu0 %v1437, 120
      %v1465 = vpop.permute.xlu0 %1464
      %1466 = vrot.lane.b32.xlu0 %v1440, 120
      %v1467 = vpop.permute.xlu0 %1466
      %vm1468 = vcmask 31744
      %v1469 = vsel %vm1468, %v1428, 0
      %v1471 = vsel %vm1468, %v1431, 0
      %v1473 = vsel %vm1468, %v1434, 0
      %v1475 = vsel %vm1468, %v1437, 0
      %v1477 = vsel %vm1468, %v1440, 0
      %v1479 = vsel %vm1468, %v1455, 0
      %v1481 = vsel %vm1468, %v1457, 0
      %v1483 = vsel %vm1468, %v1459, 0
      %v1485 = vsel %vm1468, %v1461, 0
      %v1487 = vsel %vm1468, %v1463, 0
      %v1489 = vsel %vm1468, %v1465, 0
      %v1491 = vsel %vm1468, %v1467, 0
      %1493 = vmatpush.xpose.msra.mxu0 0.0
      %1494 = vmatpush.xpose.msra.mxu0 0.0
      %1495 = vmatpush.xpose.msra.mxu0 0.0
      %1496 = vmatpush.xpose.msra.mxu0 0.0
      %1497 = vmatpush.xpose.msra.mxu0 0.0
      %1498 = vmatpush.xpose.msra.mxu0 0.0
      %1499 = vmatpush.xpose.msra.mxu0 0.0
      %1500 = vmatpush.xpose.msra.mxu0 0.0
      %1501 = vmatpush.xpose.msra.mxu0 0.0
      %1502 = vmatpush.xpose.msra.mxu0 %v1491
      %1503 = vmatpush.xpose.msra.mxu0 %v1489
      %1504 = vmatpush.xpose.msra.mxu0 %v1487
      %1505 = vmatpush.xpose.msra.mxu0 %v1485
      %1506 = vmatpush.xpose.msra.mxu0 %v1483
      %1507 = vmatpush.xpose.msra.mxu0 %v1481
      %1508 = vmatpush.xpose.msra.mxu0 %v1479
      %1509 = vmatmul.f32.gmra.mxu0 %v1469
      %v1510 = vpop.f32.mrf.mxu0
      %v1511 = vadd.f32 %v1442, %v1510
      %1512 = vmatmul.f32.gmra.mxu0 %v1471
      %v1513 = vpop.f32.mrf.mxu0
      %v1514 = vadd.f32 %v1443, %v1513
      %1515 = vmatmul.f32.gmra.mxu0 %v1473
      %v1516 = vpop.f32.mrf.mxu0
      %v1517 = vadd.f32 %v1444, %v1516
      %1518 = vmatmul.f32.gmra.mxu0 %v1475
      %v1519 = vpop.f32.mrf.mxu0
      %v1520 = vadd.f32 %v1445, %v1519
      %1521 = vmatmul.f32.gmra.mxu0 %v1477
      %v1522 = vpop.f32.mrf.mxu0
      %v1523 = vadd.f32 %v1446, %v1522
      %1524 = vdwg.mxu0
      %vm1525 = vcmask 424960
      %v1526 = vsel %vm1525, %v1511, -inf
      %1527 = vmax.xlane.f32.xlu0 %v1526
      %v1528 = vpop.xlane.xlu0 %1527
      %v1529 = vsel %vm1525, %v1514, -inf
      %1530 = vmax.xlane.f32.xlu0 %v1529
      %v1531 = vpop.xlane.xlu0 %1530
      %v1532 = vsel %vm1525, %v1517, -inf
      %1533 = vmax.xlane.f32.xlu0 %v1532
      %v1534 = vpop.xlane.xlu0 %1533
      %v1535 = vsel %vm1525, %v1520, -inf
      %1536 = vmax.xlane.f32.xlu0 %v1535
      %v1537 = vpop.xlane.xlu0 %1536
      %vm1538 = vcmask 420864
      %v1539 = vsel %vm1538, %v1523, -inf
      %1540 = vmax.xlane.f32.xlu0 %v1539
      %v1541 = vpop.xlane.xlu0 %1540
      %v1542 = vsub.f32 %v1511, %v1528
      %v1543 = vsub.f32 %v1514, %v1531
      %v1544 = vsub.f32 %v1517, %v1534
      %v1545 = vsub.f32 %v1520, %v1537
      %v1546 = vsub.f32 %v1523, %v1541
      %v1547 = vmul.f32 %v1542, 1.442695
      %v1548 = vpow.pop %v1547
      %v1549 = vmul.f32 %v1543, 1.442695
      %v1550 = vpow.pop %v1549
      %v1551 = vmul.f32 %v1544, 1.442695
      %v1552 = vpow.pop %v1551
      %v1553 = vmul.f32 %v1545, 1.442695
      %v1554 = vpow.pop %v1553
      %v1555 = vmul.f32 %v1546, 1.442695
      %v1556 = vpow.pop %v1555
      %v1557 = vsel %vm1525, %v1548, 0.0
      %1558 = vadd.xlane.f32.xlu0 %v1557
      %v1559 = vpop.xlane.xlu0 %1558
      %v1560 = vsel %vm1525, %v1550, 0.0
      %1561 = vadd.xlane.f32.xlu0 %v1560
      %v1562 = vpop.xlane.xlu0 %1561
      %v1563 = vsel %vm1525, %v1552, 0.0
      %1564 = vadd.xlane.f32.xlu0 %v1563
      %v1565 = vpop.xlane.xlu0 %1564
      %v1566 = vsel %vm1525, %v1554, 0.0
      %1567 = vadd.xlane.f32.xlu0 %v1566
      %v1568 = vpop.xlane.xlu0 %1567
      %v1569 = vsel %vm1538, %v1556, 0.0
      %1570 = vadd.xlane.f32.xlu0 %v1569
      %v1571 = vpop.xlane.xlu0 %1570
      %v1572 = vrcp.pop %v1559
      %v1573 = vrcp.pop %v1562
      %v1574 = vrcp.pop %v1565
      %v1575 = vrcp.pop %v1568
      %v1576 = vrcp.pop %v1571
      %v1577 = vmul.f32 %v1548, %v1572
      %v1578 = vmul.f32 %v1550, %v1573
      %v1579 = vmul.f32 %v1552, %v1574
      %v1580 = vmul.f32 %v1554, %v1575
      %v1581 = vmul.f32 %v1556, %v1576
      %1582 = vrot.lane.b32.xlu0 %v1422, 112
      %v1583 = vpop.permute.xlu0 %1582
      %1584 = vrot.lane.b32.xlu0 %v1425, 112
      %v1585 = vpop.permute.xlu0 %1584
      %1586 = vrot.lane.b32.xlu0 %v1428, 112
      %v1587 = vpop.permute.xlu0 %1586
      %1588 = vrot.lane.b32.xlu0 %v1431, 112
      %v1589 = vpop.permute.xlu0 %1588
      %1590 = vrot.lane.b32.xlu0 %v1434, 112
      %v1591 = vpop.permute.xlu0 %1590
      %1592 = vrot.lane.b32.xlu0 %v1437, 112
      %v1593 = vpop.permute.xlu0 %1592
      %1594 = vrot.lane.b32.xlu0 %v1440, 112
      %v1595 = vpop.permute.xlu0 %1594
      %v1603 = vsel %vm1525, %v1577, 0
      %v1606 = vsel %vm1525, %v1578, 0
      %v1609 = vsel %vm1525, %v1579, 0
      %v1612 = vsel %vm1525, %v1580, 0
      %v1615 = vsel %vm1525, %v1581, 0
      %v1617 = vsel %vm814, %v1595, 0
      %1619 = vmatpush.msra.mxu0 0.0
      %1620 = vmatpush.msra.mxu0 0.0
      %1621 = vmatpush.msra.mxu0 0.0
      %1622 = vmatpush.msra.mxu0 0.0
      %1623 = vmatpush.msra.mxu0 0.0
      %1624 = vmatpush.msra.mxu0 0.0
      %1625 = vmatpush.msra.mxu0 0.0
      %1626 = vmatpush.msra.mxu0 0.0
      %1627 = vmatpush.msra.mxu0 0.0
      %1628 = vmatpush.msra.mxu0 %v1617
      %1629 = vmatpush.msra.mxu0 %v1593
      %1630 = vmatpush.msra.mxu0 %v1591
      %1631 = vmatpush.msra.mxu0 %v1589
      %1632 = vmatpush.msra.mxu0 %v1587
      %1633 = vmatpush.msra.mxu0 %v1585
      %1634 = vmatpush.msra.mxu0 %v1583
      %1635 = vmatmul.f32.gmra.mxu0 %v1603
      %v1636 = vpop.f32.mrf.mxu0
      %v1637 = vadd.f32 0.0, %v1636
      %1638 = vmatmul.f32.gmra.mxu0 %v1606
      %v1639 = vpop.f32.mrf.mxu0
      %v1640 = vadd.f32 0.0, %v1639
      %1641 = vmatmul.f32.gmra.mxu0 %v1609
      %v1642 = vpop.f32.mrf.mxu0
      %v1643 = vadd.f32 0.0, %v1642
      %1644 = vmatmul.f32.gmra.mxu0 %v1612
      %v1645 = vpop.f32.mrf.mxu0
      %v1646 = vadd.f32 0.0, %v1645
      %1647 = vmatmul.f32.gmra.mxu0 %v1615
      %v1648 = vpop.f32.mrf.mxu0
      %v1649 = vadd.f32 0.0, %v1648
      %1650 = vdwg.mxu0
      %v1651 = vld [vmem:[%s8] sm:$0xff]
      %v1652 = vld [vmem:[%s8 + $0x8] sm:$0xff]
      %v1653 = vsel %vm1468, %v1422, 0
      %v1655 = vsel %vm1468, %v1425, 0
      %1657 = vmatpush.xpose.msra.mxu0 0.0
      %1658 = vmatpush.xpose.msra.mxu0 0.0
      %1659 = vmatpush.xpose.msra.mxu0 0.0
      %1660 = vmatpush.xpose.msra.mxu0 0.0
      %1661 = vmatpush.xpose.msra.mxu0 0.0
      %1662 = vmatpush.xpose.msra.mxu0 0.0
      %1663 = vmatpush.xpose.msra.mxu0 0.0
      %1664 = vmatpush.xpose.msra.mxu0 0.0
      %1665 = vmatpush.xpose.msra.mxu0 0.0
      %1666 = vmatpush.xpose.msra.mxu0 0.0
      %1667 = vmatpush.xpose.msra.mxu0 0.0
      %1668 = vmatpush.xpose.msra.mxu0 0.0
      %1669 = vmatpush.xpose.msra.mxu0 0.0
      %1670 = vmatpush.xpose.msra.mxu0 0.0
      %1671 = vmatpush.xpose.msra.mxu0 %v1481
      %1672 = vmatpush.xpose.msra.mxu0 %v1479
      %1673 = vmatmul.f32.gmra.mxu0 %v1653
      %v1674 = vpop.f32.mrf.mxu0
      %v1675 = vadd.f32 %v1651, %v1674
      %1676 = vmatmul.f32.gmra.mxu0 %v1655
      %v1677 = vpop.f32.mrf.mxu0
      %v1678 = vadd.f32 %v1652, %v1677
      %1679 = vdwg.mxu0
      %v1680 = vsel %vm451, %v1675, -inf
      %1681 = vmax.xlane.f32.xlu0 %v1680
      %v1682 = vpop.xlane.xlu0 %1681
      %v1683 = vsel %vm451, %v1678, -inf
      %1684 = vmax.xlane.f32.xlu0 %v1683
      %v1685 = vpop.xlane.xlu0 %1684
      %v1686 = vsub.f32 %v1675, %v1682
      %v1687 = vsub.f32 %v1678, %v1685
      %v1688 = vmul.f32 %v1686, 1.442695
      %v1689 = vpow.pop %v1688
      %v1690 = vmul.f32 %v1687, 1.442695
      %v1691 = vpow.pop %v1690
      %v1692 = vsel %vm451, %v1689, 0.0
      %1693 = vadd.xlane.f32.xlu0 %v1692
      %v1694 = vpop.xlane.xlu0 %1693
      %v1695 = vsel %vm451, %v1691, 0.0
      %1696 = vadd.xlane.f32.xlu0 %v1695
      %v1697 = vpop.xlane.xlu0 %1696
      %v1698 = vrcp.pop %v1694
      %v1699 = vrcp.pop %v1697
      %v1700 = vmul.f32 %v1689, %v1698
      %v1701 = vmul.f32 %v1691, %v1699
      %v1703 = vsel %vm451, %v1700, 0
      %v1706 = vsel %vm451, %v1701, 0
      %1708 = vmatpush.msra.mxu0 0.0
      %1709 = vmatpush.msra.mxu0 0.0
      %1710 = vmatpush.msra.mxu0 0.0
      %1711 = vmatpush.msra.mxu0 0.0
      %1712 = vmatpush.msra.mxu0 0.0
      %1713 = vmatpush.msra.mxu0 0.0
      %1714 = vmatpush.msra.mxu0 0.0
      %1715 = vmatpush.msra.mxu0 0.0
      %1716 = vmatpush.msra.mxu0 0.0
      %1717 = vmatpush.msra.mxu0 0.0
      %1718 = vmatpush.msra.mxu0 0.0
      %1719 = vmatpush.msra.mxu0 0.0
      %1720 = vmatpush.msra.mxu0 0.0
      %1721 = vmatpush.msra.mxu0 0.0
      %1722 = vmatpush.msra.mxu0 %v1585
      %1723 = vmatpush.msra.mxu0 %v1583
      %1724 = vmatmul.f32.gmra.mxu0 %v1703
      %v1725 = vpop.f32.mrf.mxu0
      %v1726 = vadd.f32 0.0, %v1725
      %1727 = vmatmul.f32.gmra.mxu0 %v1706
      %v1728 = vpop.f32.mrf.mxu0
      %v1729 = vadd.f32 0.0, %v1728
      %1730 = vdwg.mxu0
      %s1731 = scalar_lea.vmem %s7, 40
      %v1732 = vld [vmem:[%s1731] sm:$0xff]
      %v1733 = vld [vmem:[%s1731 + $0x8] sm:$0xff]
      %v1734 = vld [vmem:[%s1731 + $0x10] sm:$0xff]
      %v1735 = vld [vmem:[%s1731 + $0x18] sm:$0xff]
      %v1736 = vld [vmem:[%s1731 + $0x20] sm:$0xf]
      %1737 = vrot.lane.b32.xlu0 %v1428, 124
      %v1738 = vpop.permute.xlu0 %1737
      %1739 = vrot.lane.b32.xlu0 %v1431, 124
      %v1740 = vpop.permute.xlu0 %1739
      %1741 = vrot.lane.b32.xlu0 %v1434, 124
      %v1742 = vpop.permute.xlu0 %1741
      %1743 = vrot.lane.b32.xlu0 %v1437, 124
      %v1744 = vpop.permute.xlu0 %1743
      %1745 = vrot.lane.b32.xlu0 %v1440, 124
      %v1746 = vpop.permute.xlu0 %1745
      %1747 = vrot.lane.b32.xlu0 %v1422, 116
      %v1748 = vpop.permute.xlu0 %1747
      %1749 = vrot.lane.b32.xlu0 %v1425, 116
      %v1750 = vpop.permute.xlu0 %1749
      %1751 = vrot.lane.b32.xlu0 %v1428, 116
      %v1752 = vpop.permute.xlu0 %1751
      %1753 = vrot.lane.b32.xlu0 %v1431, 116
      %v1754 = vpop.permute.xlu0 %1753
      %1755 = vrot.lane.b32.xlu0 %v1434, 116
      %v1756 = vpop.permute.xlu0 %1755
      %1757 = vrot.lane.b32.xlu0 %v1437, 116
      %v1758 = vpop.permute.xlu0 %1757
      %1759 = vrot.lane.b32.xlu0 %v1440, 116
      %v1760 = vpop.permute.xlu0 %1759
      %v1761 = vsel %vm1468, %v1738, 0
      %v1763 = vsel %vm1468, %v1740, 0
      %v1765 = vsel %vm1468, %v1742, 0
      %v1767 = vsel %vm1468, %v1744, 0
      %v1769 = vsel %vm1468, %v1746, 0
      %v1771 = vsel %vm1468, %v1748, 0
      %v1773 = vsel %vm1468, %v1750, 0
      %v1775 = vsel %vm1468, %v1752, 0
      %v1777 = vsel %vm1468, %v1754, 0
      %v1779 = vsel %vm1468, %v1756, 0
      %v1781 = vsel %vm1468, %v1758, 0
      %v1783 = vsel %vm1468, %v1760, 0
      %1785 = vmatpush.xpose.msra.mxu0 0.0
      %1786 = vmatpush.xpose.msra.mxu0 0.0
      %1787 = vmatpush.xpose.msra.mxu0 0.0
      %1788 = vmatpush.xpose.msra.mxu0 0.0
      %1789 = vmatpush.xpose.msra.mxu0 0.0
      %1790 = vmatpush.xpose.msra.mxu0 0.0
      %1791 = vmatpush.xpose.msra.mxu0 0.0
      %1792 = vmatpush.xpose.msra.mxu0 0.0
      %1793 = vmatpush.xpose.msra.mxu0 0.0
      %1794 = vmatpush.xpose.msra.mxu0 %v1783
      %1795 = vmatpush.xpose.msra.mxu0 %v1781
      %1796 = vmatpush.xpose.msra.mxu0 %v1779
      %1797 = vmatpush.xpose.msra.mxu0 %v1777
      %1798 = vmatpush.xpose.msra.mxu0 %v1775
      %1799 = vmatpush.xpose.msra.mxu0 %v1773
      %1800 = vmatpush.xpose.msra.mxu0 %v1771
      %1801 = vmatmul.f32.gmra.mxu0 %v1761
      %v1802 = vpop.f32.mrf.mxu0
      %v1803 = vadd.f32 %v1732, %v1802
      %1804 = vmatmul.f32.gmra.mxu0 %v1763
      %v1805 = vpop.f32.mrf.mxu0
      %v1806 = vadd.f32 %v1733, %v1805
      %1807 = vmatmul.f32.gmra.mxu0 %v1765
      %v1808 = vpop.f32.mrf.mxu0
      %v1809 = vadd.f32 %v1734, %v1808
      %1810 = vmatmul.f32.gmra.mxu0 %v1767
      %v1811 = vpop.f32.mrf.mxu0
      %v1812 = vadd.f32 %v1735, %v1811
      %1813 = vmatmul.f32.gmra.mxu0 %v1769
      %v1814 = vpop.f32.mrf.mxu0
      %v1815 = vadd.f32 %v1736, %v1814
      %1816 = vdwg.mxu0
      %v1817 = vsel %vm1525, %v1803, -inf
      %1818 = vmax.xlane.f32.xlu0 %v1817
      %v1819 = vpop.xlane.xlu0 %1818
      %v1820 = vsel %vm1525, %v1806, -inf
      %1821 = vmax.xlane.f32.xlu0 %v1820
      %v1822 = vpop.xlane.xlu0 %1821
      %v1823 = vsel %vm1525, %v1809, -inf
      %1824 = vmax.xlane.f32.xlu0 %v1823
      %v1825 = vpop.xlane.xlu0 %1824
      %v1826 = vsel %vm1525, %v1812, -inf
      %1827 = vmax.xlane.f32.xlu0 %v1826
      %v1828 = vpop.xlane.xlu0 %1827
      %v1829 = vsel %vm1538, %v1815, -inf
      %1830 = vmax.xlane.f32.xlu0 %v1829
      %v1831 = vpop.xlane.xlu0 %1830
      %v1832 = vsub.f32 %v1803, %v1819
      %v1833 = vsub.f32 %v1806, %v1822
      %v1834 = vsub.f32 %v1809, %v1825
      %v1835 = vsub.f32 %v1812, %v1828
      %v1836 = vsub.f32 %v1815, %v1831
      %v1837 = vmul.f32 %v1832, 1.442695
      %v1838 = vpow.pop %v1837
      %v1839 = vmul.f32 %v1833, 1.442695
      %v1840 = vpow.pop %v1839
      %v1841 = vmul.f32 %v1834, 1.442695
      %v1842 = vpow.pop %v1841
      %v1843 = vmul.f32 %v1835, 1.442695
      %v1844 = vpow.pop %v1843
      %v1845 = vmul.f32 %v1836, 1.442695
      %v1846 = vpow.pop %v1845
      %v1847 = vsel %vm1525, %v1838, 0.0
      %1848 = vadd.xlane.f32.xlu0 %v1847
      %v1849 = vpop.xlane.xlu0 %1848
      %v1850 = vsel %vm1525, %v1840, 0.0
      %1851 = vadd.xlane.f32.xlu0 %v1850
      %v1852 = vpop.xlane.xlu0 %1851
      %v1853 = vsel %vm1525, %v1842, 0.0
      %1854 = vadd.xlane.f32.xlu0 %v1853
      %v1855 = vpop.xlane.xlu0 %1854
      %v1856 = vsel %vm1525, %v1844, 0.0
      %1857 = vadd.xlane.f32.xlu0 %v1856
      %v1858 = vpop.xlane.xlu0 %1857
      %v1859 = vsel %vm1538, %v1846, 0.0
      %1860 = vadd.xlane.f32.xlu0 %v1859
      %v1861 = vpop.xlane.xlu0 %1860
      %v1862 = vrcp.pop %v1849
      %v1863 = vrcp.pop %v1852
      %v1864 = vrcp.pop %v1855
      %v1865 = vrcp.pop %v1858
      %v1866 = vrcp.pop %v1861
      %v1867 = vmul.f32 %v1838, %v1862
      %v1868 = vmul.f32 %v1840, %v1863
      %v1869 = vmul.f32 %v1842, %v1864
      %v1870 = vmul.f32 %v1844, %v1865
      %v1871 = vmul.f32 %v1846, %v1866
      %1872 = vrot.lane.b32.xlu0 %v1422, 108
      %v1873 = vpop.permute.xlu0 %1872
      %1874 = vrot.lane.b32.xlu0 %v1425, 108
      %v1875 = vpop.permute.xlu0 %1874
      %1876 = vrot.lane.b32.xlu0 %v1428, 108
      %v1877 = vpop.permute.xlu0 %1876
      %1878 = vrot.lane.b32.xlu0 %v1431, 108
      %v1879 = vpop.permute.xlu0 %1878
      %1880 = vrot.lane.b32.xlu0 %v1434, 108
      %v1881 = vpop.permute.xlu0 %1880
      %1882 = vrot.lane.b32.xlu0 %v1437, 108
      %v1883 = vpop.permute.xlu0 %1882
      %1884 = vrot.lane.b32.xlu0 %v1440, 108
      %v1885 = vpop.permute.xlu0 %1884
      %v1893 = vsel %vm1525, %v1867, 0
      %v1896 = vsel %vm1525, %v1868, 0
      %v1899 = vsel %vm1525, %v1869, 0
      %v1902 = vsel %vm1525, %v1870, 0
      %v1905 = vsel %vm1525, %v1871, 0
      %v1907 = vsel %vm814, %v1885, 0
      %1909 = vmatpush.msra.mxu0 0.0
      %1910 = vmatpush.msra.mxu0 0.0
      %1911 = vmatpush.msra.mxu0 0.0
      %1912 = vmatpush.msra.mxu0 0.0
      %1913 = vmatpush.msra.mxu0 0.0
      %1914 = vmatpush.msra.mxu0 0.0
      %1915 = vmatpush.msra.mxu0 0.0
      %1916 = vmatpush.msra.mxu0 0.0
      %1917 = vmatpush.msra.mxu0 0.0
      %1918 = vmatpush.msra.mxu0 %v1907
      %1919 = vmatpush.msra.mxu0 %v1883
      %1920 = vmatpush.msra.mxu0 %v1881
      %1921 = vmatpush.msra.mxu0 %v1879
      %1922 = vmatpush.msra.mxu0 %v1877
      %1923 = vmatpush.msra.mxu0 %v1875
      %1924 = vmatpush.msra.mxu0 %v1873
      %1925 = vmatmul.f32.gmra.mxu0 %v1893
      %v1926 = vpop.f32.mrf.mxu0
      %v1927 = vadd.f32 0.0, %v1926
      %1928 = vmatmul.f32.gmra.mxu0 %v1896
      %v1929 = vpop.f32.mrf.mxu0
      %v1930 = vadd.f32 0.0, %v1929
      %1931 = vmatmul.f32.gmra.mxu0 %v1899
      %v1932 = vpop.f32.mrf.mxu0
      %v1933 = vadd.f32 0.0, %v1932
      %1934 = vmatmul.f32.gmra.mxu0 %v1902
      %v1935 = vpop.f32.mrf.mxu0
      %v1936 = vadd.f32 0.0, %v1935
      %1937 = vmatmul.f32.gmra.mxu0 %v1905
      %v1938 = vpop.f32.mrf.mxu0
      %v1939 = vadd.f32 0.0, %v1938
      %1940 = vdwg.mxu0
      %1941 = vrot.lane.b32.xlu0 %v1422, 124
      %v1942 = vpop.permute.xlu0 %1941
      %1943 = vrot.lane.b32.xlu0 %v1425, 124
      %v1944 = vpop.permute.xlu0 %1943
      %v1945 = vsel %vm1468, %v1942, 0
      %v1947 = vsel %vm1468, %v1944, 0
      %1949 = vmatpush.xpose.msra.mxu0 0.0
      %1950 = vmatpush.xpose.msra.mxu0 0.0
      %1951 = vmatpush.xpose.msra.mxu0 0.0
      %1952 = vmatpush.xpose.msra.mxu0 0.0
      %1953 = vmatpush.xpose.msra.mxu0 0.0
      %1954 = vmatpush.xpose.msra.mxu0 0.0
      %1955 = vmatpush.xpose.msra.mxu0 0.0
      %1956 = vmatpush.xpose.msra.mxu0 0.0
      %1957 = vmatpush.xpose.msra.mxu0 0.0
      %1958 = vmatpush.xpose.msra.mxu0 0.0
      %1959 = vmatpush.xpose.msra.mxu0 0.0
      %1960 = vmatpush.xpose.msra.mxu0 0.0
      %1961 = vmatpush.xpose.msra.mxu0 0.0
      %1962 = vmatpush.xpose.msra.mxu0 0.0
      %1963 = vmatpush.xpose.msra.mxu0 %v1773
      %1964 = vmatpush.xpose.msra.mxu0 %v1771
      %1965 = vmatmul.f32.gmra.mxu0 %v1945
      %v1966 = vpop.f32.mrf.mxu0
      %v1967 = vadd.f32 %v1651, %v1966
      %1968 = vmatmul.f32.gmra.mxu0 %v1947
      %v1969 = vpop.f32.mrf.mxu0
      %v1970 = vadd.f32 %v1652, %v1969
      %1971 = vdwg.mxu0
      %v1972 = vsel %vm451, %v1967, -inf
      %1973 = vmax.xlane.f32.xlu0 %v1972
      %v1974 = vpop.xlane.xlu0 %1973
      %v1975 = vsel %vm451, %v1970, -inf
      %1976 = vmax.xlane.f32.xlu0 %v1975
      %v1977 = vpop.xlane.xlu0 %1976
      %v1978 = vsub.f32 %v1967, %v1974
      %v1979 = vsub.f32 %v1970, %v1977
      %v1980 = vmul.f32 %v1978, 1.442695
      %v1981 = vpow.pop %v1980
      %v1982 = vmul.f32 %v1979, 1.442695
      %v1983 = vpow.pop %v1982
      %v1984 = vsel %vm451, %v1981, 0.0
      %1985 = vadd.xlane.f32.xlu0 %v1984
      %v1986 = vpop.xlane.xlu0 %1985
      %v1987 = vsel %vm451, %v1983, 0.0
      %1988 = vadd.xlane.f32.xlu0 %v1987
      %v1989 = vpop.xlane.xlu0 %1988
      %v1990 = vrcp.pop %v1986
      %v1991 = vrcp.pop %v1989
      %v1992 = vmul.f32 %v1981, %v1990
      %v1993 = vmul.f32 %v1983, %v1991
      %v1995 = vsel %vm451, %v1992, 0
      %v1998 = vsel %vm451, %v1993, 0
      %2000 = vmatpush.msra.mxu0 0.0
      %2001 = vmatpush.msra.mxu0 0.0
      %2002 = vmatpush.msra.mxu0 0.0
      %2003 = vmatpush.msra.mxu0 0.0
      %2004 = vmatpush.msra.mxu0 0.0
      %2005 = vmatpush.msra.mxu0 0.0
      %2006 = vmatpush.msra.mxu0 0.0
      %2007 = vmatpush.msra.mxu0 0.0
      %2008 = vmatpush.msra.mxu0 0.0
      %2009 = vmatpush.msra.mxu0 0.0
      %2010 = vmatpush.msra.mxu0 0.0
      %2011 = vmatpush.msra.mxu0 0.0
      %2012 = vmatpush.msra.mxu0 0.0
      %2013 = vmatpush.msra.mxu0 0.0
      %2014 = vmatpush.msra.mxu0 %v1875
      %2015 = vmatpush.msra.mxu0 %v1873
      %2016 = vmatmul.f32.gmra.mxu0 %v1995
      %v2017 = vpop.f32.mrf.mxu0
      %v2018 = vadd.f32 0.0, %v2017
      %2019 = vmatmul.f32.gmra.mxu0 %v1998
      %v2020 = vpop.f32.mrf.mxu0
      %v2021 = vadd.f32 0.0, %v2020
      %2022 = vdwg.mxu0
      %2025 = vrot.lane.b32.xlu0 %v2018, 4
      %v2026 = vpop.permute.xlu0 %2025
      %2027 = vrot.lane.b32.xlu0 %v2021, 4
      %v2028 = vpop.permute.xlu0 %2027
      %v2031 = vsel %vm1468, %v1726, %v2026
      %v2032 = vsel %vm1468, %v1729, %v2028
      %2038 = vrot.lane.b32.xlu0 %v1927, 4
      %v2039 = vpop.permute.xlu0 %2038
      %2040 = vrot.lane.b32.xlu0 %v1930, 4
      %v2041 = vpop.permute.xlu0 %2040
      %2042 = vrot.lane.b32.xlu0 %v1933, 4
      %v2043 = vpop.permute.xlu0 %2042
      %2044 = vrot.lane.b32.xlu0 %v1936, 4
      %v2045 = vpop.permute.xlu0 %2044
      %2046 = vrot.lane.b32.xlu0 %v1939, 4
      %v2047 = vpop.permute.xlu0 %2046
      %v2053 = vsel %vm1468, %v1637, %v2039
      %v2054 = vsel %vm1468, %v1640, %v2041
      %v2055 = vsel %vm1468, %v1643, %v2043
      %v2056 = vsel %vm1468, %v1646, %v2045
      %v2057 = vsel %vm1468, %v1649, %v2047
      %v2058 = vld [vmem:[%s9] sm:$0xff]
      %v2059 = vld [vmem:[%s10] sm:$0x1]
      %v2061 = vperm.slane %v2059, 0
      %v2064 = vsel %vm443, %v2031, 0
      %v2067 = vsel %vm443, %v2032, 0
      %v2070 = vsel %vm443, %v2053, 0
      %v2073 = vsel %vm443, %v2054, 0
      %v2076 = vsel %vm443, %v2055, 0
      %v2079 = vsel %vm443, %v2056, 0
      %v2082 = vsel %vm443, %v2057, 0
      %2084 = vmatpush.msra.mxu0 0.0
      %2085 = vmatpush.msra.mxu0 0.0
      %2086 = vmatpush.msra.mxu0 0.0
      %2087 = vmatpush.msra.mxu0 0.0
      %2088 = vmatpush.msra.mxu0 0.0
      %2089 = vmatpush.msra.mxu0 0.0
      %2090 = vmatpush.msra.mxu0 0.0
      %2091 = vmatpush.msra.mxu0 0.0
      %2092 = vmatpush.msra.mxu0 0.0
      %2093 = vmatpush.msra.mxu0 0.0
      %2094 = vmatpush.msra.mxu0 0.0
      %2095 = vmatpush.msra.mxu0 0.0
      %2096 = vmatpush.msra.mxu0 0.0
      %2097 = vmatpush.msra.mxu0 0.0
      %2098 = vmatpush.msra.mxu0 0.0
      %2099 = vmatpush.msra.mxu0 %v2058
      %2100 = vmatmul.f32.gmra.mxu0 %v2064
      %v2101 = vpop.f32.mrf.mxu0
      %v2102 = vadd.f32 %v2061, %v2101
      %2103 = vmatmul.f32.gmra.mxu0 %v2067
      %v2104 = vpop.f32.mrf.mxu0
      %v2105 = vadd.f32 %v2061, %v2104
      %2106 = vmatmul.f32.gmra.mxu0 %v2070
      %v2107 = vpop.f32.mrf.mxu0
      %v2108 = vadd.f32 %v2061, %v2107
      %2109 = vmatmul.f32.gmra.mxu0 %v2073
      %v2110 = vpop.f32.mrf.mxu0
      %v2111 = vadd.f32 %v2061, %v2110
      %2112 = vmatmul.f32.gmra.mxu0 %v2076
      %v2113 = vpop.f32.mrf.mxu0
      %v2114 = vadd.f32 %v2061, %v2113
      %2115 = vmatmul.f32.gmra.mxu0 %v2079
      %v2116 = vpop.f32.mrf.mxu0
      %v2117 = vadd.f32 %v2061, %v2116
      %2118 = vmatmul.f32.gmra.mxu0 %v2082
      %v2119 = vpop.f32.mrf.mxu0
      %v2120 = vadd.f32 %v2061, %v2119
      %2121 = vdwg.mxu0
      %2122 = vst.msk [vmem:[%s386] sm:$0xff] %vm443, %v2102
      %2123 = vst.msk [vmem:[%s386 + $0x8] sm:$0xff] %vm443, %v2105
      %2124 = vst.msk [vmem:[%s386 + $0x10] sm:$0xff] %vm443, %v2108
      %2125 = vst.msk [vmem:[%s386 + $0x18] sm:$0xff] %vm443, %v2111
      %2126 = vst.msk [vmem:[%s386 + $0x20] sm:$0xff] %vm443, %v2114
      %2127 = vst.msk [vmem:[%s386 + $0x28] sm:$0xff] %vm443, %v2117
      %vm2128 = vcmask 60416
      %2129 = vst.msk [vmem:[%s386 + $0x30] sm:$0xf] %vm2128, %v2120
      %p2130 = scmp.lt.s32.totalorder %s22, 1
      %s2131 = scalar_select %p2130, %s22, 1
      %s2132 = smul.addr %s2131, 7
      %s2133 = smul.addr %s2132, 8
      %s2134 = scalar_lea.vmem %s11, %s2133
      // Predicated region
      $region65: #{split_attn_forward.1} parent=63 // pred_check
        %p2135 = pneg %p276
      $region66: #{split_attn_forward.1} parent=63 // pred_check_branch
        %2137 = sbr.rel (%p2135) target = $region68
      $region67: #{split_attn_forward.1} parent=63 // pred_region
        _
      $region68: #{split_attn_forward.1} parent=63 // pred_fallthru
        _
    $region64: #{split_attn_forward.1} parent=5 // pred_fallthru
      _
    %p2138 = scmp.le.s32.totalorder 2, %s17
    // Predicated region
    $region69: #{split_attn_forward.1} parent=5 // pred_check
      %p2139 = pneg %p2138
    $region70: #{split_attn_forward.1} parent=5 // pred_check_branch
      %2141 = sbr.rel (%p2139) target = $region72
    $region71: #{split_attn_forward.1} parent=5 // pred_region
      %s2142 = ssub.s32 %s17, 2
      // Predicated region
      $region73: #{split_attn_forward.1} parent=71 // pred_check
        %p2143 = pneg %p282
      $region74: #{split_attn_forward.1} parent=71 // pred_check_branch
        %2145 = sbr.rel (%p2143) target = $region76
      $region75: #{split_attn_forward.1} parent=71 // pred_region
        %p2146 = scmp.lt.s32.totalorder %s23, 1
        %s2147 = scalar_select %p2146, %s23, 1
        %s2148 = smul.addr %s2147, 7
        %s2149 = smul.addr %s2148, 8
        %s2150 = scalar_lea.vmem %s11, %s2149
      $region76: #{split_attn_forward.1} parent=71 // pred_fallthru
        _
    $region72: #{split_attn_forward.1} parent=5 // pred_fallthru
      _
  $region6: #{split_attn_forward.1} parent=0 // loop_footer
    %s21 = sadd.s32 1, %s17
  $region7: #{split_attn_forward.1} parent=0 // loop_footer_branch
    %16 = sbr.rel target = $region3
  $region8: #{split_attn_forward.1} parent=0 // loop_exit
    _

</llo_original>
